<compile_context>
chip_gen: v5e
topology: v5e:2x2
jax: 0.10.0
libtpu: 0.0.40
codegen_flags: <defaults>
</compile_context>

<pallas_src>
import functools
import math

import jax
import jax.numpy as jnp
import numpy as np
from jax.experimental import pallas as pl
from jax.experimental.pallas import tpu as pltpu


# ---------------------------------------------------------------------------
# small in-kernel helpers (pure jnp, traced inside the Pallas kernel)
# ---------------------------------------------------------------------------
def _gelu_tanh(x):
    # exactly the GELU module: 0.5 * x * (1 + tanh(sqrt(2/pi) * (x + 0.044715*x^3)))
    return 0.5 * x * (1.0 + jnp.tanh(math.sqrt(2.0 / math.pi) * (x + 0.044715 * x ** 3)))


def _layer_norm(x, w, b, eps=1e-5):
    mu = jnp.mean(x, axis=-1, keepdims=True)
    var = jnp.mean((x - mu) ** 2, axis=-1, keepdims=True)
    return (x - mu) * jax.lax.rsqrt(var + eps) * w + b


# ---------------------------------------------------------------------------
# fused encoder stack kernel: grid = (batch_tiles, n_layers)
# ---------------------------------------------------------------------------
def _encoder_stack_kernel(x_ref, mask_ref,
                          wqkv_ref, bqkv_ref, wo_ref, bo_ref,
                          ln1w_ref, ln1b_ref, w1_ref, b1_ref,
                          w2_ref, b2_ref, ln2w_ref, ln2b_ref,
                          enc_ref, attn_ref, scores_scr,
                          *, n_heads, d_k, d_v):
    l = pl.program_id(1)                                     # layer index (sequential)
    TB, S, D = enc_ref.shape
    H = n_heads

    # layer 0 of this batch tile: seed the resident activation block
    @pl.when(l == 0)
    def _seed():
        enc_ref[...] = x_ref[...]

    x = enc_ref[...].reshape(TB * S, D)                      # (TB*S, D) f32 running state

    # --- fused QKV projection: one MXU matmul (bf16 operands, f32 accumulate) ---
    qkv = jnp.dot(x.astype(jnp.bfloat16), wqkv_ref[0],
                  preferred_element_type=jnp.float32) + bqkv_ref[0]   # (TB*S, 2*H*dk + H*dv)

    scale = 1.0 / math.sqrt(d_k)
    # fold 1/sqrt(d_k) into q; cast once to bf16 so the attention-core matmuls run bf16 on MXU
    q_all = (qkv[:, : H * d_k] * scale).astype(jnp.bfloat16)
    k_all = qkv[:, H * d_k: 2 * H * d_k].astype(jnp.bfloat16)
    v_all = qkv[:, 2 * H * d_k:].astype(jnp.bfloat16)

    # --- per-head QK^T (bf16 x bf16 -> f32), staged into a (TB, H, S, S) f32 scratch ---
    for h in range(H):                                       # static unroll over heads
        q = q_all[:, h * d_k:(h + 1) * d_k].reshape(TB, S, d_k)
        k = k_all[:, h * d_k:(h + 1) * d_k].reshape(TB, S, d_k)
        scores_scr[:, h] = jnp.einsum("bqd,bkd->bqk", q, k,
                                      preferred_element_type=jnp.float32)

    # --- softmax batched over all heads: one mask add / max / exp / reciprocal / store ---
    scores = scores_scr[...] + mask_ref[...]                 # (TB,H,S,S) + (TB,1,1,S) additive
    scores = scores - jnp.max(scores, axis=-1, keepdims=True)
    p = jnp.exp(scores)
    attn = p * pl.reciprocal(jnp.sum(p, axis=-1, keepdims=True), approx=True)
    attn_ref[:, 0] = attn.astype(attn_ref.dtype)             # bf16 store, final (B,L,H,S,S) layout

    # --- per-head P·V (bf16 x bf16 -> f32) ---
    attn_bf = attn.astype(jnp.bfloat16)
    ctx_parts = []
    for h in range(H):
        v = v_all[:, h * d_v:(h + 1) * d_v].reshape(TB, S, d_v)
        ctx_parts.append(
            jnp.einsum("bqk,bkd->bqd", attn_bf[:, h], v,
                       preferred_element_type=jnp.float32).reshape(TB * S, d_v))
    context = jnp.concatenate(ctx_parts, axis=-1)            # (TB*S, H*d_v)

    # --- attention output projection + residual + LayerNorm ---
    attn_out = jnp.dot(context.astype(jnp.bfloat16), wo_ref[0],
                       preferred_element_type=jnp.float32) + bo_ref[0]
    y = _layer_norm(attn_out + x, ln1w_ref[0], ln1b_ref[0])

    # --- position-wise feed forward (tanh-GELU) + residual + LayerNorm ---
    h1 = _gelu_tanh(jnp.dot(y.astype(jnp.bfloat16), w1_ref[0],
                            preferred_element_type=jnp.float32) + b1_ref[0])
    ff = jnp.dot(h1.astype(jnp.bfloat16), w2_ref[0],
                 preferred_element_type=jnp.float32) + b2_ref[0]
    out = _layer_norm(ff + y, ln2w_ref[0], ln2b_ref[0])

    enc_ref[...] = out.reshape(TB, S, D)                     # state for next layer / final output


def _nbytes(shape, dtype):
    return int(np.prod(shape)) * jnp.dtype(dtype).itemsize


def encoder_stack_pallas(x, mask_add, stacked, *, n_heads, d_k, d_v, batch_tile=None):
    """x: (B,S,D) f32, mask_add: (B,1,1,S) f32 additive mask, stacked: per-layer weights."""
    B, S, D = x.shape
    H = n_heads
    L = stacked["wqkv"].shape[0]
    TB = batch_tile if batch_tile is not None else B          # TB=B -> weights streamed once
    assert B % TB == 0

    names = ("wqkv", "bqkv", "wo", "bo", "ln1w", "ln1b",
             "w1", "b1", "w2", "b2", "ln2w", "ln2b")
    ws = [stacked[n] for n in names]

    in_specs = ([pl.BlockSpec((TB, S, D), lambda b, l: (b, 0, 0)),        # activation seed
                 pl.BlockSpec((TB, 1, 1, S), lambda b, l: (b, 0, 0, 0))]  # additive pad mask
                + [pl.BlockSpec((1,) + w.shape[1:], lambda b, l: (l, 0, 0))  # one layer's weights
                   for w in ws])

    out_shapes = (jax.ShapeDtypeStruct((B, S, D), jnp.float32),
                  jax.ShapeDtypeStruct((B, L, H, S, S), jnp.bfloat16))    # final layout, bf16
    out_specs = (pl.BlockSpec((TB, S, D), lambda b, l: (b, 0, 0)),        # revisited across l
                 pl.BlockSpec((TB, 1, H, S, S), lambda b, l: (b, l, 0, 0, 0)))

    # explicit VMEM budget: resident blocks (x2 for double buffering) + biggest temporaries
    d_ff = stacked["w1"].shape[-1]
    qkv_w = stacked["wqkv"].shape[-1]
    weight_block_bytes = sum(_nbytes((1,) + w.shape[1:], w.dtype) for w in ws)
    resident = (2 * _nbytes((TB, S, D), jnp.float32)            # x block
                + 2 * _nbytes((TB, 1, 1, S), jnp.float32)       # mask block
                + 2 * weight_block_bytes                        # double-buffered weights
                + 2 * _nbytes((TB, S, D), jnp.float32)          # enc out block
                + 2 * _nbytes((TB, 1, H, S, S), jnp.bfloat16)   # attn out block
                + _nbytes((TB, H, S, S), jnp.float32))          # scores scratch
    temps = (4 * _nbytes((TB * S, max(qkv_w, d_ff, D)), jnp.float32)
             + 4 * _nbytes((TB, H, S, S), jnp.float32))
    vmem_limit = int(min(64 << 20, max(32 << 20, 1.5 * (resident + temps))))

    enc, attns = pl.pallas_call(
        functools.partial(_encoder_stack_kernel, n_heads=H, d_k=d_k, d_v=d_v),
        out_shape=out_shapes,
        grid=(B // TB, L),
        in_specs=in_specs,
        out_specs=out_specs,
        scratch_shapes=[pltpu.VMEM((TB, H, S, S), jnp.float32)],
        compiler_params=pltpu.CompilerParams(
            dimension_semantics=("parallel", "arbitrary"),      # batch tiles || ; layers seq
            vmem_limit_bytes=vmem_limit),
    )(x, mask_add, *ws)

    return enc, attns                                           # (B,S,D) f32, (B,L,H,S,S) bf16


# ---------------------------------------------------------------------------
# per-layer weight stacking (fused QKV weight, bf16 matmul operands)
# ---------------------------------------------------------------------------
def _stack_layer_params(layers):
    def stk(name, dtype=None):
        a = jnp.stack([lp[name] for lp in layers], axis=0)
        return a.astype(dtype) if dtype is not None else a

    wqkv = jnp.stack(
        [jnp.concatenate([lp["wq"], lp["wk"], lp["wv"]], axis=1) for lp in layers],
        axis=0).astype(jnp.bfloat16)
    bqkv = jnp.stack(
        [jnp.concatenate([lp["bq"], lp["bk"], lp["bv"]], axis=1) for lp in layers], axis=0)

    return {
        "wqkv": wqkv, "bqkv": bqkv,
        "wo": stk("wo", jnp.bfloat16), "bo": stk("bo"),
        "ln1w": stk("ln1w"), "ln1b": stk("ln1b"),
        "w1": stk("w1", jnp.bfloat16), "b1": stk("b1"),
        "w2": stk("w2", jnp.bfloat16), "b2": stk("b2"),
        "ln2w": stk("ln2w"), "ln2b": stk("ln2b"),
    }


# ---------------------------------------------------------------------------
# Encoder.forward  (embedding / positional encoding / mask build are glue)
# ---------------------------------------------------------------------------
def positional_encoding_table(max_len, dim):
    pos = np.arange(max_len, dtype=np.float32)[:, None]
    div = np.exp(np.arange(0.0, dim, 2.0, dtype=np.float32) * -(math.log(10000.0) / dim))
    pe = np.zeros((max_len, dim), dtype=np.float32)
    pe[:, 0::2] = np.sin(pos * div)
    pe[:, 1::2] = np.cos(pos * div)
    return jnp.asarray(pe)


def encoder_forward(params, x_input, *, pad_index, n_heads, d_k, d_v, n_layers,
                    seg_input=None, seg_emb=None, batch_tile=None):
    B, S = x_input.shape
    emb = params["emb"][x_input]                                 # EmbLayer(x_input)
    enc0 = emb + params["pe"][None, :S, :]                       # pos_emb (dropout = eval identity)
    if seg_input is not None:                                    # optional segment embedding path
        enc0 = enc0 + seg_emb[seg_input]

    # get_attn_pad_mask -> additive mask on key positions, broadcast over heads & query rows
    mask_add = jnp.where(x_input == pad_index, -1e9, 0.0).astype(jnp.float32)[:, None, None, :]

    stacked = _stack_layer_params(params["layers"])
    enc, attns = encoder_stack_pallas(enc0.astype(jnp.float32), mask_add, stacked,
                                      n_heads=n_heads, d_k=d_k, d_v=d_v,
                                      batch_tile=batch_tile)
    return enc, attns                                            # (B,S,D), (B,L,H,S,S)


# ---------------------------------------------------------------------------
# deterministic parameter construction
# ---------------------------------------------------------------------------
def make_params(key, *, vocab, d_model, d_ff, d_k, d_v, n_heads, n_layers, max_len=64):
    def nxt():
        nonlocal key
        key, sub = jax.random.split(key)
        return sub

    def rnd(shape, scale=0.05):
        return (scale * jax.random.normal(nxt(), shape)).astype(jnp.float32)

    params = {
        "emb": rnd((vocab, d_model)),
        "pe": positional_encoding_table(max_len, d_model),
        "layers": [],
    }
    for _ in range(n_layers):
        params["layers"].append({
            "wq": rnd((d_model, n_heads * d_k)), "bq": rnd((1, n_heads * d_k)),
            "wk": rnd((d_model, n_heads * d_k)), "bk": rnd((1, n_heads * d_k)),
            "wv": rnd((d_model, n_heads * d_v)), "bv": rnd((1, n_heads * d_v)),
            "wo": rnd((n_heads * d_v, d_model)), "bo": rnd((1, d_model)),
            "ln1w": jnp.ones((1, d_model), jnp.float32), "ln1b": jnp.zeros((1, d_model), jnp.float32),
            "w1": rnd((d_model, d_ff)), "b1": rnd((1, d_ff)),
            "w2": rnd((d_ff, d_model)), "b2": rnd((1, d_model)),
            "ln2w": jnp.ones((1, d_model), jnp.float32), "ln2b": jnp.zeros((1, d_model), jnp.float32),
        })
    return params


# ---------------------------------------------------------------------------
# pure-JAX f32 reference (module-true math) for a sanity check
# ---------------------------------------------------------------------------
def _reference_forward(params, x_input, *, pad_index, n_heads, d_k, d_v, n_layers):
    B, S = x_input.shape
    enc = params["emb"][x_input] + params["pe"][None, :S, :]
    mask = (x_input == pad_index)[:, None, None, :]              # (B, 1, 1, S)
    attns = []
    for li in range(n_layers):
        p = params["layers"][li]
        q = (enc @ p["wq"] + p["bq"]).reshape(B, S, n_heads, d_k).transpose(0, 2, 1, 3)
        k = (enc @ p["wk"] + p["bk"]).reshape(B, S, n_heads, d_k).transpose(0, 2, 1, 3)
        v = (enc @ p["wv"] + p["bv"]).reshape(B, S, n_heads, d_v).transpose(0, 2, 1, 3)
        scores = jnp.einsum("bhqd,bhkd->bhqk", q, k) / np.sqrt(d_k)
        scores = jnp.where(mask, -1e9, scores)
        attn = jax.nn.softmax(scores, axis=-1)
        attns.append(attn)
        ctx = jnp.einsum("bhqk,bhkd->bhqd", attn, v).transpose(0, 2, 1, 3).reshape(B, S, n_heads * d_v)
        out = ctx @ p["wo"] + p["bo"]
        y = _layer_norm(out + enc, p["ln1w"], p["ln1b"])
        h1 = _gelu_tanh(y @ p["w1"] + p["b1"])
        ff = h1 @ p["w2"] + p["b2"]
        enc = _layer_norm(ff + y, p["ln2w"], p["ln2b"])
    return enc, jnp.stack(attns, axis=1)                          # (B,S,D), (B,L,H,S,S)


# ---------------------------------------------------------------------------
if __name__ == "__main__":
    # small, module-consistent sizes (correctness only; real sizes should be 128-multiples)
    B, S = 2, 8
    d_model, d_ff = 32, 64
    d_k = d_v = 8
    n_heads, n_layers = 2, 2
    pad_index = 0
    vocab = 20

    root = jax.random.PRNGKey(0)
    pkey, dkey = jax.random.split(root)

    params = make_params(pkey, vocab=vocab, d_model=d_model, d_ff=d_ff,
                         d_k=d_k, d_v=d_v, n_heads=n_heads, n_layers=n_layers, max_len=64)

    x_input = jax.random.randint(dkey, (B, S), 1, vocab).astype(jnp.int32)
    x_input = x_input.at[1, S - 2:].set(pad_index)                # a few padded key positions

    # batch_tile=1 exercises the parallel batch-tile grid axis (2 tiles); on single-TC chips
    # batch_tile=None (one tile) avoids re-streaming the layer weights per tile.
    enc, attns = encoder_forward(params, x_input, pad_index=pad_index,
                                 n_heads=n_heads, d_k=d_k, d_v=d_v, n_layers=n_layers,
                                 batch_tile=1)
    enc = jax.block_until_ready(enc)
    attns = jax.block_until_ready(attns)

    ref_enc, ref_attns = _reference_forward(params, x_input, pad_index=pad_index,
                                            n_heads=n_heads, d_k=d_k, d_v=d_v,
                                            n_layers=n_layers)

    assert enc.shape == (B, S, d_model)
    assert attns.shape == (B, n_layers, n_heads, S, S)
    assert bool(jnp.all(jnp.isfinite(enc))) and bool(jnp.all(jnp.isfinite(attns.astype(jnp.float32))))
    # kernel uses bf16 matmul operands (f32 accumulation) and bf16 attention-map storage ->
    # compare to the f32 reference with bf16-level tolerances
    assert bool(jnp.allclose(enc, ref_enc, atol=3e-2, rtol=3e-2))
    assert bool(jnp.allclose(attns.astype(jnp.float32), ref_attns, atol=2e-2, rtol=2e-2))
    print("KERNEL_OK")
</pallas_src>

<mosaic_0001>
module attributes {stable_mosaic.version = 11 : i64} {
  func.func @_encoder_stack_kernel(%arg0: i32, %arg1: i32, %arg2: memref<1x8x32xf32, #tpu.memory_space<vmem>>, %arg3: memref<1x1x1x8xf32, #tpu.memory_space<vmem>>, %arg4: memref<1x32x48xbf16, #tpu.memory_space<vmem>>, %arg5: memref<1x1x48xf32, #tpu.memory_space<vmem>>, %arg6: memref<1x16x32xbf16, #tpu.memory_space<vmem>>, %arg7: memref<1x1x32xf32, #tpu.memory_space<vmem>>, %arg8: memref<1x1x32xf32, #tpu.memory_space<vmem>>, %arg9: memref<1x1x32xf32, #tpu.memory_space<vmem>>, %arg10: memref<1x32x64xbf16, #tpu.memory_space<vmem>>, %arg11: memref<1x1x64xf32, #tpu.memory_space<vmem>>, %arg12: memref<1x64x32xbf16, #tpu.memory_space<vmem>>, %arg13: memref<1x1x32xf32, #tpu.memory_space<vmem>>, %arg14: memref<1x1x32xf32, #tpu.memory_space<vmem>>, %arg15: memref<1x1x32xf32, #tpu.memory_space<vmem>>, %arg16: memref<1x8x32xf32, #tpu.memory_space<vmem>>, %arg17: memref<1x1x2x8x8xbf16, #tpu.memory_space<vmem>>, %arg18: memref<1x2x8x8xf32, #tpu.memory_space<vmem>>) attributes {dimension_semantics = [#tpu.dimension_semantics<parallel>, #tpu.dimension_semantics<arbitrary>], iteration_bounds = array<i64: 2, 2>, scalar_prefetch = 0 : i64, scratch_operands = 1 : i64, tpu.core_type = #tpu.core_type<tc>, window_params = [{transform_indices = @transform_0, window_bounds = array<i64: 1, 8, 32>}, {transform_indices = @transform_1, window_bounds = array<i64: 1, 1, 1, 8>}, {transform_indices = @transform_2, window_bounds = array<i64: 1, 32, 48>}, {transform_indices = @transform_3, window_bounds = array<i64: 1, 1, 48>}, {transform_indices = @transform_4, window_bounds = array<i64: 1, 16, 32>}, {transform_indices = @transform_5, window_bounds = array<i64: 1, 1, 32>}, {transform_indices = @transform_6, window_bounds = array<i64: 1, 1, 32>}, {transform_indices = @transform_7, window_bounds = array<i64: 1, 1, 32>}, {transform_indices = @transform_8, window_bounds = array<i64: 1, 32, 64>}, {transform_indices = @transform_9, window_bounds = array<i64: 1, 1, 64>}, {transform_indices = @transform_10, window_bounds = array<i64: 1, 64, 32>}, {transform_indices = @transform_11, window_bounds = array<i64: 1, 1, 32>}, {transform_indices = @transform_12, window_bounds = array<i64: 1, 1, 32>}, {transform_indices = @transform_13, window_bounds = array<i64: 1, 1, 32>}, {transform_indices = @transform_14, window_bounds = array<i64: 1, 8, 32>}, {transform_indices = @transform_15, window_bounds = array<i64: 1, 1, 2, 8, 8>}]} {
    %c0_i32 = arith.constant 0 : i32
    %0 = arith.cmpi eq, %arg1, %c0_i32 : i32
    %1 = arith.extui %0 : i1 to i32
    %c0_i32_0 = arith.constant 0 : i32
    %2 = arith.cmpi ne, %1, %c0_i32_0 : i32
    scf.if %2 {
      %c0_86 = arith.constant 0 : index
      %c0_87 = arith.constant 0 : index
      %c0_88 = arith.constant 0 : index
      %162 = vector.load %arg2[%c0_86, %c0_87, %c0_88] : memref<1x8x32xf32, #tpu.memory_space<vmem>>, vector<1x8x32xf32>
      %c0_89 = arith.constant 0 : index
      %c0_90 = arith.constant 0 : index
      %c0_91 = arith.constant 0 : index
      %163 = vector.load %arg16[%c0_89, %c0_90, %c0_91] : memref<1x8x32xf32, #tpu.memory_space<vmem>>, vector<1x8x32xf32>
      tpu.vector_store %arg16[%c0_89, %c0_90, %c0_91], %162 {strides = array<i32>} : memref<1x8x32xf32, #tpu.memory_space<vmem>>, vector<1x8x32xf32>,
    } else {
    }
    %c0 = arith.constant 0 : index
    %c0_1 = arith.constant 0 : index
    %c0_2 = arith.constant 0 : index
    %3 = vector.load %arg16[%c0, %c0_1, %c0_2] : memref<1x8x32xf32, #tpu.memory_space<vmem>>, vector<1x8x32xf32>
    %4 = vector.shape_cast %3 : vector<1x8x32xf32> to vector<8x32xf32>
    %5 = arith.truncf %4 : vector<8x32xf32> to vector<8x32xbf16>
    %c0_3 = arith.constant 0 : index
    %c0_4 = arith.constant 0 : index
    %c0_5 = arith.constant 0 : index
    %6 = vector.load %arg4[%c0_3, %c0_4, %c0_5] : memref<1x32x48xbf16, #tpu.memory_space<vmem>>, vector<1x32x48xbf16>
    %7 = vector.shape_cast %6 : vector<1x32x48xbf16> to vector<32x48xbf16>
    %cst = arith.constant dense<0.000000e+00> : vector<8x48xf32>
    %8 = tpu.matmul %5, %7, %cst {dimension_numbers = #tpu.dot_dimension_numbers<[1], [0], [0], [1], [0, 0, 1, 1], [], []>} : vector<8x32xbf16>, vector<32x48xbf16>, vector<8x48xf32> -> vector<8x48xf32>
    %c0_6 = arith.constant 0 : index
    %c0_7 = arith.constant 0 : index
    %c0_8 = arith.constant 0 : index
    %9 = vector.load %arg5[%c0_6, %c0_7, %c0_8] : memref<1x1x48xf32, #tpu.memory_space<vmem>>, vector<1x1x48xf32>
    %10 = vector.shape_cast %9 : vector<1x1x48xf32> to vector<1x48xf32>
    %11 = vector.broadcast %10 : vector<1x48xf32> to vector<8x48xf32>
    %12 = arith.addf %8, %11 : vector<8x48xf32>
    %13 = vector.extract_strided_slice %12 {offsets = [0, 0], sizes = [8, 16], strides = [1, 1]} : vector<8x48xf32> to vector<8x16xf32>
    %cst_9 = arith.constant 0.353553385 : f32
    %14 = vector.broadcast %cst_9 : f32 to vector<8x16xf32>
    %15 = arith.mulf %13, %14 : vector<8x16xf32>
    %16 = arith.truncf %15 : vector<8x16xf32> to vector<8x16xbf16>
    %17 = vector.extract_strided_slice %12 {offsets = [0, 16], sizes = [8, 16], strides = [1, 1]} : vector<8x48xf32> to vector<8x16xf32>
    %18 = arith.truncf %17 : vector<8x16xf32> to vector<8x16xbf16>
    %19 = vector.extract_strided_slice %12 {offsets = [0, 32], sizes = [8, 16], strides = [1, 1]} : vector<8x48xf32> to vector<8x16xf32>
    %20 = arith.truncf %19 : vector<8x16xf32> to vector<8x16xbf16>
    %21 = vector.extract_strided_slice %16 {offsets = [0, 0], sizes = [8, 8], strides = [1, 1]} : vector<8x16xbf16> to vector<8x8xbf16>
    %22 = vector.shape_cast %21 : vector<8x8xbf16> to vector<1x8x8xbf16>
    %23 = vector.extract_strided_slice %18 {offsets = [0, 0], sizes = [8, 8], strides = [1, 1]} : vector<8x16xbf16> to vector<8x8xbf16>
    %24 = vector.shape_cast %23 : vector<8x8xbf16> to vector<1x8x8xbf16>
    "tpu.trace_start"() <{level = 10 : i32, message = "bqd,bkd->bqk"}> : () -> ()
    %cst_10 = arith.constant dense<0.000000e+00> : vector<1x8x8xf32>
    %25 = tpu.matmul %22, %24, %cst_10 {dimension_numbers = #tpu.dot_dimension_numbers<[2], [2], [1], [1], [0, 0, 0, 1, 1, 1], [0], [0]>} : vector<1x8x8xbf16>, vector<1x8x8xbf16>, vector<1x8x8xf32> -> vector<1x8x8xf32>
    "tpu.trace_stop"() : () -> ()
    %c0_11 = arith.constant 0 : index
    %c0_12 = arith.constant 0 : index
    %c0_13 = arith.constant 0 : index
    %c0_14 = arith.constant 0 : index
    %26 = vector.load %arg18[%c0_11, %c0_12, %c0_13, %c0_14] : memref<1x2x8x8xf32, #tpu.memory_space<vmem>>, vector<1x1x8x8xf32>
    %27 = vector.shape_cast %26 : vector<1x1x8x8xf32> to vector<1x8x8xf32>
    %28 = vector.shape_cast %25 : vector<1x8x8xf32> to vector<1x1x8x8xf32>
    tpu.vector_store %arg18[%c0_11, %c0_12, %c0_13, %c0_14], %28 {strides = array<i32>} : memref<1x2x8x8xf32, #tpu.memory_space<vmem>>, vector<1x1x8x8xf32>,
    %29 = vector.extract_strided_slice %16 {offsets = [0, 8], sizes = [8, 8], strides = [1, 1]} : vector<8x16xbf16> to vector<8x8xbf16>
    %30 = vector.shape_cast %29 : vector<8x8xbf16> to vector<1x8x8xbf16>
    %31 = vector.extract_strided_slice %18 {offsets = [0, 8], sizes = [8, 8], strides = [1, 1]} : vector<8x16xbf16> to vector<8x8xbf16>
    %32 = vector.shape_cast %31 : vector<8x8xbf16> to vector<1x8x8xbf16>
    "tpu.trace_start"() <{level = 10 : i32, message = "bqd,bkd->bqk"}> : () -> ()
    %cst_15 = arith.constant dense<0.000000e+00> : vector<1x8x8xf32>
    %33 = tpu.matmul %30, %32, %cst_15 {dimension_numbers = #tpu.dot_dimension_numbers<[2], [2], [1], [1], [0, 0, 0, 1, 1, 1], [0], [0]>} : vector<1x8x8xbf16>, vector<1x8x8xbf16>, vector<1x8x8xf32> -> vector<1x8x8xf32>
    "tpu.trace_stop"() : () -> ()
    %c0_16 = arith.constant 0 : index
    %c1 = arith.constant 1 : index
    %c0_17 = arith.constant 0 : index
    %c0_18 = arith.constant 0 : index
    %34 = vector.load %arg18[%c0_16, %c1, %c0_17, %c0_18] : memref<1x2x8x8xf32, #tpu.memory_space<vmem>>, vector<1x1x8x8xf32>
    %35 = vector.shape_cast %34 : vector<1x1x8x8xf32> to vector<1x8x8xf32>
    %36 = vector.shape_cast %33 : vector<1x8x8xf32> to vector<1x1x8x8xf32>
    tpu.vector_store %arg18[%c0_16, %c1, %c0_17, %c0_18], %36 {strides = array<i32>} : memref<1x2x8x8xf32, #tpu.memory_space<vmem>>, vector<1x1x8x8xf32>,
    %c0_19 = arith.constant 0 : index
    %c0_20 = arith.constant 0 : index
    %c0_21 = arith.constant 0 : index
    %c0_22 = arith.constant 0 : index
    %37 = vector.load %arg18[%c0_19, %c0_20, %c0_21, %c0_22] : memref<1x2x8x8xf32, #tpu.memory_space<vmem>>, vector<1x2x8x8xf32>
    %c0_23 = arith.constant 0 : index
    %c0_24 = arith.constant 0 : index
    %c0_25 = arith.constant 0 : index
    %c0_26 = arith.constant 0 : index
    %38 = vector.load %arg3[%c0_23, %c0_24, %c0_25, %c0_26] : memref<1x1x1x8xf32, #tpu.memory_space<vmem>>, vector<1x1x1x8xf32>
    %39 = vector.broadcast %38 : vector<1x1x1x8xf32> to vector<1x2x8x8xf32>
    %40 = arith.addf %37, %39 : vector<1x2x8x8xf32>
    %cst_27 = arith.constant dense<0xFF800000> : vector<1x2x8xf32>
    %41 = vector.multi_reduction <maximumf>, %40, %cst_27 [3] : vector<1x2x8x8xf32> to vector<1x2x8xf32>
    %42 = vector.shape_cast %41 : vector<1x2x8xf32> to vector<1x2x8x1xf32>
    %43 = vector.broadcast %42 : vector<1x2x8x1xf32> to vector<1x2x8x8xf32>
    %44 = arith.subf %40, %43 : vector<1x2x8x8xf32>
    %45 = math.exp %44 : vector<1x2x8x8xf32>
    %cst_28 = arith.constant dense<0.000000e+00> : vector<1x2x8xf32>
    %46 = vector.multi_reduction <add>, %45, %cst_28 [3] : vector<1x2x8x8xf32> to vector<1x2x8xf32>
    %47 = vector.shape_cast %46 : vector<1x2x8xf32> to vector<1x2x8x1xf32>
    %48 = tpu.reciprocal %47 {approx = true} : vector<1x2x8x1xf32> -> vector<1x2x8x1xf32>
    %49 = vector.broadcast %48 : vector<1x2x8x1xf32> to vector<1x2x8x8xf32>
    %50 = arith.mulf %45, %49 : vector<1x2x8x8xf32>
    %51 = arith.truncf %50 : vector<1x2x8x8xf32> to vector<1x2x8x8xbf16>
    %c0_29 = arith.constant 0 : index
    %c0_30 = arith.constant 0 : index
    %c0_31 = arith.constant 0 : index
    %c0_32 = arith.constant 0 : index
    %c0_33 = arith.constant 0 : index
    %52 = vector.load %arg17[%c0_29, %c0_30, %c0_31, %c0_32, %c0_33] : memref<1x1x2x8x8xbf16, #tpu.memory_space<vmem>>, vector<1x1x2x8x8xbf16>
    %53 = vector.shape_cast %52 : vector<1x1x2x8x8xbf16> to vector<1x2x8x8xbf16>
    %54 = vector.shape_cast %51 : vector<1x2x8x8xbf16> to vector<1x1x2x8x8xbf16>
    tpu.vector_store %arg17[%c0_29, %c0_30, %c0_31, %c0_32, %c0_33], %54 {strides = array<i32>} : memref<1x1x2x8x8xbf16, #tpu.memory_space<vmem>>, vector<1x1x2x8x8xbf16>,
    %55 = arith.truncf %50 : vector<1x2x8x8xf32> to vector<1x2x8x8xbf16>
    %56 = vector.extract_strided_slice %20 {offsets = [0, 0], sizes = [8, 8], strides = [1, 1]} : vector<8x16xbf16> to vector<8x8xbf16>
    %57 = vector.shape_cast %56 : vector<8x8xbf16> to vector<1x8x8xbf16>
    %58 = vector.extract_strided_slice %55 {offsets = [0, 0, 0, 0], sizes = [1, 1, 8, 8], strides = [1, 1, 1, 1]} : vector<1x2x8x8xbf16> to vector<1x1x8x8xbf16>
    %59 = vector.shape_cast %58 : vector<1x1x8x8xbf16> to vector<1x8x8xbf16>
    "tpu.trace_start"() <{level = 10 : i32, message = "bqk,bkd->bqd"}> : () -> ()
    %cst_34 = arith.constant dense<0.000000e+00> : vector<1x8x8xf32>
    %60 = tpu.matmul %59, %57, %cst_34 {dimension_numbers = #tpu.dot_dimension_numbers<[2], [1], [1], [2], [0, 0, 0, 1, 1, 2], [0], [0]>} : vector<1x8x8xbf16>, vector<1x8x8xbf16>, vector<1x8x8xf32> -> vector<1x8x8xf32>
    "tpu.trace_stop"() : () -> ()
    %61 = vector.shape_cast %60 : vector<1x8x8xf32> to vector<8x8xf32>
    %62 = vector.extract_strided_slice %20 {offsets = [0, 8], sizes = [8, 8], strides = [1, 1]} : vector<8x16xbf16> to vector<8x8xbf16>
    %63 = vector.shape_cast %62 : vector<8x8xbf16> to vector<1x8x8xbf16>
    %64 = vector.extract_strided_slice %55 {offsets = [0, 1, 0, 0], sizes = [1, 1, 8, 8], strides = [1, 1, 1, 1]} : vector<1x2x8x8xbf16> to vector<1x1x8x8xbf16>
    %65 = vector.shape_cast %64 : vector<1x1x8x8xbf16> to vector<1x8x8xbf16>
    "tpu.trace_start"() <{level = 10 : i32, message = "bqk,bkd->bqd"}> : () -> ()
    %cst_35 = arith.constant dense<0.000000e+00> : vector<1x8x8xf32>
    %66 = tpu.matmul %65, %63, %cst_35 {dimension_numbers = #tpu.dot_dimension_numbers<[2], [1], [1], [2], [0, 0, 0, 1, 1, 2], [0], [0]>} : vector<1x8x8xbf16>, vector<1x8x8xbf16>, vector<1x8x8xf32> -> vector<1x8x8xf32>
    "tpu.trace_stop"() : () -> ()
    %67 = vector.shape_cast %66 : vector<1x8x8xf32> to vector<8x8xf32>
    %68 = tpu.concatenate %61, %67 in 1 : vector<8x8xf32>, vector<8x8xf32> -> vector<8x16xf32>
    %69 = arith.truncf %68 : vector<8x16xf32> to vector<8x16xbf16>
    %c0_36 = arith.constant 0 : index
    %c0_37 = arith.constant 0 : index
    %c0_38 = arith.constant 0 : index
    %70 = vector.load %arg6[%c0_36, %c0_37, %c0_38] : memref<1x16x32xbf16, #tpu.memory_space<vmem>>, vector<1x16x32xbf16>
    %71 = vector.shape_cast %70 : vector<1x16x32xbf16> to vector<16x32xbf16>
    %cst_39 = arith.constant dense<0.000000e+00> : vector<8x32xf32>
    %72 = tpu.matmul %69, %71, %cst_39 {dimension_numbers = #tpu.dot_dimension_numbers<[1], [0], [0], [1], [0, 0, 1, 1], [], []>} : vector<8x16xbf16>, vector<16x32xbf16>, vector<8x32xf32> -> vector<8x32xf32>
    %c0_40 = arith.constant 0 : index
    %c0_41 = arith.constant 0 : index
    %c0_42 = arith.constant 0 : index
    %73 = vector.load %arg7[%c0_40, %c0_41, %c0_42] : memref<1x1x32xf32, #tpu.memory_space<vmem>>, vector<1x1x32xf32>
    %74 = vector.shape_cast %73 : vector<1x1x32xf32> to vector<1x32xf32>
    %75 = vector.broadcast %74 : vector<1x32xf32> to vector<8x32xf32>
    %76 = arith.addf %72, %75 : vector<8x32xf32>
    %77 = arith.addf %76, %4 : vector<8x32xf32>
    %c0_43 = arith.constant 0 : index
    %c0_44 = arith.constant 0 : index
    %c0_45 = arith.constant 0 : index
    %78 = vector.load %arg8[%c0_43, %c0_44, %c0_45] : memref<1x1x32xf32, #tpu.memory_space<vmem>>, vector<1x1x32xf32>
    %79 = vector.shape_cast %78 : vector<1x1x32xf32> to vector<1x32xf32>
    %c0_46 = arith.constant 0 : index
    %c0_47 = arith.constant 0 : index
    %c0_48 = arith.constant 0 : index
    %80 = vector.load %arg9[%c0_46, %c0_47, %c0_48] : memref<1x1x32xf32, #tpu.memory_space<vmem>>, vector<1x1x32xf32>
    %81 = vector.shape_cast %80 : vector<1x1x32xf32> to vector<1x32xf32>
    %cst_49 = arith.constant dense<0.000000e+00> : vector<8xf32>
    %82 = vector.multi_reduction <add>, %77, %cst_49 [1] : vector<8x32xf32> to vector<8xf32>
    %83 = vector.shape_cast %82 : vector<8xf32> to vector<8x1xf32>
    %cst_50 = arith.constant 3.200000e+01 : f32
    %84 = vector.broadcast %cst_50 : f32 to vector<8x1xf32>
    %85 = arith.divf %83, %84 : vector<8x1xf32>
    %86 = vector.broadcast %85 : vector<8x1xf32> to vector<8x32xf32>
    %87 = arith.subf %77, %86 : vector<8x32xf32>
    %88 = arith.mulf %87, %87 : vector<8x32xf32>
    %cst_51 = arith.constant dense<0.000000e+00> : vector<8xf32>
    %89 = vector.multi_reduction <add>, %88, %cst_51 [1] : vector<8x32xf32> to vector<8xf32>
    %90 = vector.shape_cast %89 : vector<8xf32> to vector<8x1xf32>
    %cst_52 = arith.constant 3.200000e+01 : f32
    %91 = vector.broadcast %cst_52 : f32 to vector<8x1xf32>
    %92 = arith.divf %90, %91 : vector<8x1xf32>
    %93 = vector.broadcast %85 : vector<8x1xf32> to vector<8x32xf32>
    %94 = arith.subf %77, %93 : vector<8x32xf32>
    %cst_53 = arith.constant 9.99999974E-6 : f32
    %95 = vector.broadcast %cst_53 : f32 to vector<8x1xf32>
    %96 = arith.addf %92, %95 : vector<8x1xf32>
    %97 = math.rsqrt %96 : vector<8x1xf32>
    %98 = vector.broadcast %97 : vector<8x1xf32> to vector<8x32xf32>
    %99 = arith.mulf %94, %98 : vector<8x32xf32>
    %100 = vector.broadcast %79 : vector<1x32xf32> to vector<8x32xf32>
    %101 = arith.mulf %99, %100 : vector<8x32xf32>
    %102 = vector.broadcast %81 : vector<1x32xf32> to vector<8x32xf32>
    %103 = arith.addf %101, %102 : vector<8x32xf32>
    %104 = arith.truncf %103 : vector<8x32xf32> to vector<8x32xbf16>
    %c0_54 = arith.constant 0 : index
    %c0_55 = arith.constant 0 : index
    %c0_56 = arith.constant 0 : index
    %105 = vector.load %arg10[%c0_54, %c0_55, %c0_56] : memref<1x32x64xbf16, #tpu.memory_space<vmem>>, vector<1x32x64xbf16>
    %106 = vector.shape_cast %105 : vector<1x32x64xbf16> to vector<32x64xbf16>
    %cst_57 = arith.constant dense<0.000000e+00> : vector<8x64xf32>
    %107 = tpu.matmul %104, %106, %cst_57 {dimension_numbers = #tpu.dot_dimension_numbers<[1], [0], [0], [1], [0, 0, 1, 1], [], []>} : vector<8x32xbf16>, vector<32x64xbf16>, vector<8x64xf32> -> vector<8x64xf32>
    %c0_58 = arith.constant 0 : index
    %c0_59 = arith.constant 0 : index
    %c0_60 = arith.constant 0 : index
    %108 = vector.load %arg11[%c0_58, %c0_59, %c0_60] : memref<1x1x64xf32, #tpu.memory_space<vmem>>, vector<1x1x64xf32>
    %109 = vector.shape_cast %108 : vector<1x1x64xf32> to vector<1x64xf32>
    %110 = vector.broadcast %109 : vector<1x64xf32> to vector<8x64xf32>
    %111 = arith.addf %107, %110 : vector<8x64xf32>
    %cst_61 = arith.constant 5.000000e-01 : f32
    %112 = vector.broadcast %cst_61 : f32 to vector<8x64xf32>
    %113 = arith.mulf %112, %111 : vector<8x64xf32>
    %114 = arith.mulf %111, %111 : vector<8x64xf32>
    %115 = arith.mulf %111, %114 : vector<8x64xf32>
    %cst_62 = arith.constant 4.471500e-02 : f32
    %116 = vector.broadcast %cst_62 : f32 to vector<8x64xf32>
    %117 = arith.mulf %116, %115 : vector<8x64xf32>
    %118 = arith.addf %111, %117 : vector<8x64xf32>
    %cst_63 = arith.constant 0.797884583 : f32
    %119 = vector.broadcast %cst_63 : f32 to vector<8x64xf32>
    %120 = arith.mulf %119, %118 : vector<8x64xf32>
    %121 = math.tanh %120 : vector<8x64xf32>
    %cst_64 = arith.constant 1.000000e+00 : f32
    %122 = vector.broadcast %cst_64 : f32 to vector<8x64xf32>
    %123 = arith.addf %122, %121 : vector<8x64xf32>
    %124 = arith.mulf %113, %123 : vector<8x64xf32>
    %125 = arith.truncf %124 : vector<8x64xf32> to vector<8x64xbf16>
    %c0_65 = arith.constant 0 : index
    %c0_66 = arith.constant 0 : index
    %c0_67 = arith.constant 0 : index
    %126 = vector.load %arg12[%c0_65, %c0_66, %c0_67] : memref<1x64x32xbf16, #tpu.memory_space<vmem>>, vector<1x64x32xbf16>
    %127 = vector.shape_cast %126 : vector<1x64x32xbf16> to vector<64x32xbf16>
    %cst_68 = arith.constant dense<0.000000e+00> : vector<8x32xf32>
    %128 = tpu.matmul %125, %127, %cst_68 {dimension_numbers = #tpu.dot_dimension_numbers<[1], [0], [0], [1], [0, 0, 1, 1], [], []>} : vector<8x64xbf16>, vector<64x32xbf16>, vector<8x32xf32> -> vector<8x32xf32>
    %c0_69 = arith.constant 0 : index
    %c0_70 = arith.constant 0 : index
    %c0_71 = arith.constant 0 : index
    %129 = vector.load %arg13[%c0_69, %c0_70, %c0_71] : memref<1x1x32xf32, #tpu.memory_space<vmem>>, vector<1x1x32xf32>
    %130 = vector.shape_cast %129 : vector<1x1x32xf32> to vector<1x32xf32>
    %131 = vector.broadcast %130 : vector<1x32xf32> to vector<8x32xf32>
    %132 = arith.addf %128, %131 : vector<8x32xf32>
    %133 = arith.addf %132, %103 : vector<8x32xf32>
    %c0_72 = arith.constant 0 : index
    %c0_73 = arith.constant 0 : index
    %c0_74 = arith.constant 0 : index
    %134 = vector.load %arg14[%c0_72, %c0_73, %c0_74] : memref<1x1x32xf32, #tpu.memory_space<vmem>>, vector<1x1x32xf32>
    %135 = vector.shape_cast %134 : vector<1x1x32xf32> to vector<1x32xf32>
    %c0_75 = arith.constant 0 : index
    %c0_76 = arith.constant 0 : index
    %c0_77 = arith.constant 0 : index
    %136 = vector.load %arg15[%c0_75, %c0_76, %c0_77] : memref<1x1x32xf32, #tpu.memory_space<vmem>>, vector<1x1x32xf32>
    %137 = vector.shape_cast %136 : vector<1x1x32xf32> to vector<1x32xf32>
    %cst_78 = arith.constant dense<0.000000e+00> : vector<8xf32>
    %138 = vector.multi_reduction <add>, %133, %cst_78 [1] : vector<8x32xf32> to vector<8xf32>
    %139 = vector.shape_cast %138 : vector<8xf32> to vector<8x1xf32>
    %cst_79 = arith.constant 3.200000e+01 : f32
    %140 = vector.broadcast %cst_79 : f32 to vector<8x1xf32>
    %141 = arith.divf %139, %140 : vector<8x1xf32>
    %142 = vector.broadcast %141 : vector<8x1xf32> to vector<8x32xf32>
    %143 = arith.subf %133, %142 : vector<8x32xf32>
    %144 = arith.mulf %143, %143 : vector<8x32xf32>
    %cst_80 = arith.constant dense<0.000000e+00> : vector<8xf32>
    %145 = vector.multi_reduction <add>, %144, %cst_80 [1] : vector<8x32xf32> to vector<8xf32>
    %146 = vector.shape_cast %145 : vector<8xf32> to vector<8x1xf32>
    %cst_81 = arith.constant 3.200000e+01 : f32
    %147 = vector.broadcast %cst_81 : f32 to vector<8x1xf32>
    %148 = arith.divf %146, %147 : vector<8x1xf32>
    %149 = vector.broadcast %141 : vector<8x1xf32> to vector<8x32xf32>
    %150 = arith.subf %133, %149 : vector<8x32xf32>
    %cst_82 = arith.constant 9.99999974E-6 : f32
    %151 = vector.broadcast %cst_82 : f32 to vector<8x1xf32>
    %152 = arith.addf %148, %151 : vector<8x1xf32>
    %153 = math.rsqrt %152 : vector<8x1xf32>
    %154 = vector.broadcast %153 : vector<8x1xf32> to vector<8x32xf32>
    %155 = arith.mulf %150, %154 : vector<8x32xf32>
    %156 = vector.broadcast %135 : vector<1x32xf32> to vector<8x32xf32>
    %157 = arith.mulf %155, %156 : vector<8x32xf32>
    %158 = vector.broadcast %137 : vector<1x32xf32> to vector<8x32xf32>
    %159 = arith.addf %157, %158 : vector<8x32xf32>
    %160 = vector.shape_cast %159 : vector<8x32xf32> to vector<1x8x32xf32>
    %c0_83 = arith.constant 0 : index
    %c0_84 = arith.constant 0 : index
    %c0_85 = arith.constant 0 : index
    %161 = vector.load %arg16[%c0_83, %c0_84, %c0_85] : memref<1x8x32xf32, #tpu.memory_space<vmem>>, vector<1x8x32xf32>
    tpu.vector_store %arg16[%c0_83, %c0_84, %c0_85], %160 {strides = array<i32>} : memref<1x8x32xf32, #tpu.memory_space<vmem>>, vector<1x8x32xf32>,
    return
  }
  func.func @transform_0(%arg0: i32, %arg1: i32) -> (i32, i32, i32) {
    %c0_i32 = arith.constant 0 : i32
    %c0_i32_0 = arith.constant 0 : i32
    %c0_i32_1 = arith.constant 0 : i32
    return %arg0, %c0_i32, %c0_i32_0 : i32, i32, i32
  }
  func.func @transform_1(%arg0: i32, %arg1: i32) -> (i32, i32, i32, i32) {
    %c0_i32 = arith.constant 0 : i32
    %c0_i32_0 = arith.constant 0 : i32
    %c0_i32_1 = arith.constant 0 : i32
    %c0_i32_2 = arith.constant 0 : i32
    return %arg0, %c0_i32, %c0_i32_0, %c0_i32_1 : i32, i32, i32, i32
  }
  func.func @transform_2(%arg0: i32, %arg1: i32) -> (i32, i32, i32) {
    %c0_i32 = arith.constant 0 : i32
    %c0_i32_0 = arith.constant 0 : i32
    %c0_i32_1 = arith.constant 0 : i32
    return %arg1, %c0_i32, %c0_i32_0 : i32, i32, i32
  }
  func.func @transform_3(%arg0: i32, %arg1: i32) -> (i32, i32, i32) {
    %c0_i32 = arith.constant 0 : i32
    %c0_i32_0 = arith.constant 0 : i32
    %c0_i32_1 = arith.constant 0 : i32
    return %arg1, %c0_i32, %c0_i32_0 : i32, i32, i32
  }
  func.func @transform_4(%arg0: i32, %arg1: i32) -> (i32, i32, i32) {
    %c0_i32 = arith.constant 0 : i32
    %c0_i32_0 = arith.constant 0 : i32
    %c0_i32_1 = arith.constant 0 : i32
    return %arg1, %c0_i32, %c0_i32_0 : i32, i32, i32
  }
  func.func @transform_5(%arg0: i32, %arg1: i32) -> (i32, i32, i32) {
    %c0_i32 = arith.constant 0 : i32
    %c0_i32_0 = arith.constant 0 : i32
    %c0_i32_1 = arith.constant 0 : i32
    return %arg1, %c0_i32, %c0_i32_0 : i32, i32, i32
  }
  func.func @transform_6(%arg0: i32, %arg1: i32) -> (i32, i32, i32) {
    %c0_i32 = arith.constant 0 : i32
    %c0_i32_0 = arith.constant 0 : i32
    %c0_i32_1 = arith.constant 0 : i32
    return %arg1, %c0_i32, %c0_i32_0 : i32, i32, i32
  }
  func.func @transform_7(%arg0: i32, %arg1: i32) -> (i32, i32, i32) {
    %c0_i32 = arith.constant 0 : i32
    %c0_i32_0 = arith.constant 0 : i32
    %c0_i32_1 = arith.constant 0 : i32
    return %arg1, %c0_i32, %c0_i32_0 : i32, i32, i32
  }
  func.func @transform_8(%arg0: i32, %arg1: i32) -> (i32, i32, i32) {
    %c0_i32 = arith.constant 0 : i32
    %c0_i32_0 = arith.constant 0 : i32
    %c0_i32_1 = arith.constant 0 : i32
    return %arg1, %c0_i32, %c0_i32_0 : i32, i32, i32
  }
  func.func @transform_9(%arg0: i32, %arg1: i32) -> (i32, i32, i32) {
    %c0_i32 = arith.constant 0 : i32
    %c0_i32_0 = arith.constant 0 : i32
    %c0_i32_1 = arith.constant 0 : i32
    return %arg1, %c0_i32, %c0_i32_0 : i32, i32, i32
  }
  func.func @transform_10(%arg0: i32, %arg1: i32) -> (i32, i32, i32) {
    %c0_i32 = arith.constant 0 : i32
    %c0_i32_0 = arith.constant 0 : i32
    %c0_i32_1 = arith.constant 0 : i32
    return %arg1, %c0_i32, %c0_i32_0 : i32, i32, i32
  }
  func.func @transform_11(%arg0: i32, %arg1: i32) -> (i32, i32, i32) {
    %c0_i32 = arith.constant 0 : i32
    %c0_i32_0 = arith.constant 0 : i32
    %c0_i32_1 = arith.constant 0 : i32
    return %arg1, %c0_i32, %c0_i32_0 : i32, i32, i32
  }
  func.func @transform_12(%arg0: i32, %arg1: i32) -> (i32, i32, i32) {
    %c0_i32 = arith.constant 0 : i32
    %c0_i32_0 = arith.constant 0 : i32
    %c0_i32_1 = arith.constant 0 : i32
    return %arg1, %c0_i32, %c0_i32_0 : i32, i32, i32
  }
  func.func @transform_13(%arg0: i32, %arg1: i32) -> (i32, i32, i32) {
    %c0_i32 = arith.constant 0 : i32
    %c0_i32_0 = arith.constant 0 : i32
    %c0_i32_1 = arith.constant 0 : i32
    return %arg1, %c0_i32, %c0_i32_0 : i32, i32, i32
  }
  func.func @transform_14(%arg0: i32, %arg1: i32) -> (i32, i32, i32) {
    %c0_i32 = arith.constant 0 : i32
    %c0_i32_0 = arith.constant 0 : i32
    %c0_i32_1 = arith.constant 0 : i32
    return %arg0, %c0_i32, %c0_i32_0 : i32, i32, i32
  }
  func.func @transform_15(%arg0: i32, %arg1: i32) -> (i32, i32, i32, i32, i32) {
    %c0_i32 = arith.constant 0 : i32
    %c0_i32_0 = arith.constant 0 : i32
    %c0_i32_1 = arith.constant 0 : i32
    %c0_i32_2 = arith.constant 0 : i32
    return %arg0, %arg1, %c0_i32, %c0_i32_0, %c0_i32_1 : i32, i32, i32, i32, i32
  }
}

</mosaic_0001>

<llo_original>
// kernel: tpu_custom_call.1
$region0: #{tpu_custom_call.1}
  #allocation0 [shape = 'u32[]', space=smem, size = 0x4, offset = 0x4, fixed_abs, tag = 'smem constant byte address 0x4 - core index']
  #allocation1 [shape = 'u32[72,128]{1,0:T(1,128)}', space=vmem, size = 0x9000, scoped, tag = 'internal scratch']
  #allocation2 [shape = 'f32[1,2,8,8]{3,2,1,0:T(8,128)}', space=vmem, size = 0x2000, scoped, tag = 'scratch operand']
  %s0 = inlined_call_operand.vmem [shape: f32[2,8,32], index: 0, kind: input, shape index: {}]
  %s1 = inlined_call_operand.hbm [shape: f32[2,1,1,8], index: 1, kind: input, shape index: {}]
  %s2 = inlined_call_operand.vmem [shape: bf16[2,32,48], index: 2, kind: input, shape index: {}]
  %s3 = inlined_call_operand.hbm [shape: f32[2,1,48], index: 3, kind: input, shape index: {}]
  %s4 = inlined_call_operand.vmem [shape: bf16[2,16,32], index: 4, kind: input, shape index: {}]
  %s5 = inlined_call_operand.vmem [shape: f32[2,1,32], index: 5, kind: input, shape index: {}]
  %s6 = inlined_call_operand.vmem [shape: f32[2,1,32], index: 6, kind: input, shape index: {}]
  %s7 = inlined_call_operand.hbm [shape: f32[2,1,32], index: 7, kind: input, shape index: {}]
  %s8 = inlined_call_operand.vmem [shape: bf16[2,32,64], index: 8, kind: input, shape index: {}]
  %s9 = inlined_call_operand.vmem [shape: f32[2,1,64], index: 9, kind: input, shape index: {}]
  %s10 = inlined_call_operand.vmem [shape: bf16[2,64,32], index: 10, kind: input, shape index: {}]
  %s11 = inlined_call_operand.vmem [shape: f32[2,1,32], index: 11, kind: input, shape index: {}]
  %s12 = inlined_call_operand.vmem [shape: f32[2,1,32], index: 12, kind: input, shape index: {}]
  %s13 = inlined_call_operand.hbm [shape: f32[2,1,32], index: 13, kind: input, shape index: {}]
  %s14 = inlined_call_operand.hbm [shape: f32[2,8,32], index: 14, kind: output, shape index: {0}]
  %s15 = inlined_call_operand.hbm [shape: bf16[2,2,2,8,8], index: 15, kind: output, shape index: {1}]
  %16 = xla_tuple %s14, %s15
  %s17 = sld [smem:[#allocation0]]
  $region117: #{tpu_custom_call.1} parent=0
    _
  %s19 = ssub.s32 1, %s17
  %s20 = scalar_select 0, %s19, %s17
  $region1: #{tpu_custom_call.1} parent=0
    #allocation3 [shape = 'u8[1024]{0}', space=vmem, size = 0x400, scoped, tag = 'input window, operand 1']
    #allocation4 [shape = 's32[2]{0}', space=sflag, size = 0x8, scoped, tag = 'scoped memory for tpu_custom_call.1']
    #allocation5 [shape = 's32[2]{0}', space=sflag, size = 0x8, scoped, tag = 'scoped memory for tpu_custom_call.1']
    #allocation6 [shape = 'u8[1024]{0}', space=vmem, size = 0x400, scoped, tag = 'input window, operand 3']
    #allocation7 [shape = 's32[2]{0}', space=sflag, size = 0x8, scoped, tag = 'scoped memory for tpu_custom_call.1']
    #allocation8 [shape = 'u8[1024]{0}', space=vmem, size = 0x400, scoped, tag = 'input window, operand 7']
    #allocation9 [shape = 'u8[1024]{0}', space=vmem, size = 0x400, scoped, tag = 'input window, operand 13']
    #allocation10 [shape = 's32[2]{0}', space=sflag, size = 0x8, scoped, tag = 'scoped memory for tpu_custom_call.1']
    #allocation11 [shape = 'u8[8192]{0}', space=vmem, size = 0x2000, scoped, tag = 'output window, operand 0']
    #allocation12 [shape = 'u8[8192]{0}', space=vmem, size = 0x2000, scoped, tag = 'output window, operand 1']
    #allocation13 [shape = 's32[2]{0}', space=sflag, size = 0x8, scoped, tag = 'scoped memory for tpu_custom_call.1']
    %21 = vsyncpa [#allocation4], 0
    %s22 = scalar_lea.sflag [#allocation4], 1
    %23 = vsyncpa %s22, 0
    %24 = vsyncpa [#allocation7], 0
    %s25 = scalar_lea.sflag [#allocation7], 1
    %26 = vsyncpa %s25, 0
    %27 = vsyncpa [#allocation10], 0
    %s28 = scalar_lea.sflag [#allocation10], 1
    %29 = vsyncpa %s28, 0
    %30 = vsyncpa [#allocation5], 0
    %s31 = scalar_lea.sflag [#allocation5], 1
    %32 = vsyncpa %s31, 0
    %33 = vsyncpa [#allocation13], 0
    %s34 = scalar_lea.sflag [#allocation13], 1
    %35 = vsyncpa %s34, 0
    loop: start=0, step=1, limit=6
    $region2: #{tpu_custom_call.1} parent=1 // loop_pre_header
      _
    $region3: #{tpu_custom_call.1} parent=1 // loop_header
      %s37 = sphi 0, %s41
      %p38 = scmp.ge.s32.totalorder %s37, 6
      %s44 = sphi 0, %s56
      %s45 = sphi 0, %s52
      %s46 = sphi 0, %s44
      %s47 = sphi 0, %s45
      %s48 = sphi 0, %s46
      %s49 = sphi 0, %s47
      %s59 = sphi 0, %s61
      %s62 = sphi 0, %s59
      %s63 = sphi 0, %s62
      %s79 = sphi 0, %s63
      %s85 = sphi 0, %s87
      %s88 = sphi 0, %s85
      %s89 = sphi 0, %s88
      %s105 = sphi 0, %s89
      %s111 = sphi 0, %s113
      %s114 = sphi 0, %s111
      %s115 = sphi 0, %s114
      %s131 = sphi 0, %s115
      %s137 = sphi 0, %s139
      %s140 = sphi 0, %s137
      %s141 = sphi 0, %s140
      %s157 = sphi 0, %s141
      %s163 = sphi 0, %s165
      %s166 = sphi 0, %s163
      %s167 = sphi 0, %s166
      %s183 = sphi 0, %s167
      %s189 = sphi 0, %s191
      %s192 = sphi 0, %s189
      %s193 = sphi 0, %s192
      %s209 = sphi 0, %s193
      %s215 = sphi 0, %s217
      %s218 = sphi 0, %s215
      %s219 = sphi 0, %s218
      %s235 = sphi 0, %s219
      %s241 = sphi 0, %s243
      %s244 = sphi 0, %s241
      %s245 = sphi 0, %s244
      %s261 = sphi 0, %s245
      %s267 = sphi 0, %s269
      %s270 = sphi 0, %s267
      %s271 = sphi 0, %s270
      %s287 = sphi 0, %s271
      %s293 = sphi 0, %s295
      %s296 = sphi 0, %s293
      %s297 = sphi 0, %s296
      %s313 = sphi 0, %s297
      %s319 = sphi 0, %s321
      %s322 = sphi 0, %s319
      %s323 = sphi 0, %s322
      %s339 = sphi 0, %s323
      %s345 = sphi 0, %s347
      %s348 = sphi 0, %s345
      %s349 = sphi 0, %s348
      %s365 = sphi 0, %s349
      %s371 = sphi 0, %s373
      %s374 = sphi 0, %s371
      %s375 = sphi 0, %s374
      %s391 = sphi 0, %s375
      %s397 = sphi 0, %s399
      %s400 = sphi 0, %s397
      %s401 = sphi 0, %s400
      %s417 = sphi 0, %s401
      %s423 = sphi 0, %s425
      %s426 = sphi 0, %s423
      %s427 = sphi 0, %s426
      %s443 = sphi 0, %s427
      %s451 = sphi 0, %s453
      %s454 = sphi 0, %s451
      %s455 = sphi 0, %s454
      %s471 = sphi 0, %s455
    $region4: #{tpu_custom_call.1} parent=1 // loop_header_branch
      %40 = sbr.rel (%p38) target = $region8
    $region5: #{tpu_custom_call.1} parent=1 // loop_body
      %s42 = ssub.s32 %s37, 1
      %s43 = ssub.s32 %s37, 2
      %s50 = sadd.s32 1, %s45
      %p51 = scmp.ge.s32.totalorder %s50, 2
      %s52 = scalar_select %p51, 0, %s50
      %s53 = sadd.s32 1, %s44
      %s54 = scalar_select %p51, %s53, %s44
      %p55 = scmp.ge.s32.totalorder %s54, 2
      %s56 = scalar_select %p55, 0, %s54
      %s57 = ssub.s32 %s44, %s56
      %p58 = scmp.eq.s32.totalorder %s57, 0
      %s60 = sadd.s32 %s59, 1
      %s61 = scalar_select %p58, %s59, %s60
      %p64 = pneg %p58
      %p65 = scmp.eq.s32.totalorder %s37, 3
      %p66 = por %p64, %p65
      %p67 = scmp.ne.s32.totalorder %s59, %s62
      %p68 = scmp.eq.s32.totalorder %s37, 0
      %p69 = por %p67, %p68
      %p70 = scmp.ne.s32.totalorder %s59, %s62
      %p71 = scmp.eq.s32.totalorder %s42, 3
      %p72 = por %p70, %p71
      %p73 = scmp.ne.s32.totalorder %s62, %s63
      %p74 = scmp.eq.s32.totalorder %s42, 0
      %p75 = por %p73, %p74
      %p76 = scmp.ne.s32.totalorder %s62, %s63
      %p77 = scmp.eq.s32.totalorder %s43, 3
      %p78 = por %p76, %p77
      %p80 = scmp.ne.s32.totalorder %s63, %s79
      %p81 = scmp.eq.s32.totalorder %s43, 0
      %p82 = por %p80, %p81
      %s83 = ssub.s32 %s44, %s56
      %p84 = scmp.eq.s32.totalorder %s83, 0
      %s86 = sadd.s32 %s85, 1
      %s87 = scalar_select %p84, %s85, %s86
      %p90 = pneg %p84
      %p91 = scmp.eq.s32.totalorder %s37, 3
      %p92 = por %p90, %p91
      %p93 = scmp.ne.s32.totalorder %s85, %s88
      %p94 = scmp.eq.s32.totalorder %s37, 0
      %p95 = por %p93, %p94
      %p96 = scmp.ne.s32.totalorder %s85, %s88
      %p97 = scmp.eq.s32.totalorder %s42, 3
      %p98 = por %p96, %p97
      %p99 = scmp.ne.s32.totalorder %s88, %s89
      %p100 = scmp.eq.s32.totalorder %s42, 0
      %p101 = por %p99, %p100
      %p102 = scmp.ne.s32.totalorder %s88, %s89
      %p103 = scmp.eq.s32.totalorder %s43, 3
      %p104 = por %p102, %p103
      %p106 = scmp.ne.s32.totalorder %s89, %s105
      %p107 = scmp.eq.s32.totalorder %s43, 0
      %p108 = por %p106, %p107
      %s109 = ssub.s32 %s45, %s52
      %p110 = scmp.eq.s32.totalorder %s109, 0
      %s112 = sadd.s32 %s111, 1
      %s113 = scalar_select %p110, %s111, %s112
      %p116 = pneg %p110
      %p117 = scmp.eq.s32.totalorder %s37, 3
      %p118 = por %p116, %p117
      %p119 = scmp.ne.s32.totalorder %s111, %s114
      %p120 = scmp.eq.s32.totalorder %s37, 0
      %p121 = por %p119, %p120
      %p122 = scmp.ne.s32.totalorder %s111, %s114
      %p123 = scmp.eq.s32.totalorder %s42, 3
      %p124 = por %p122, %p123
      %p125 = scmp.ne.s32.totalorder %s114, %s115
      %p126 = scmp.eq.s32.totalorder %s42, 0
      %p127 = por %p125, %p126
      %p128 = scmp.ne.s32.totalorder %s114, %s115
      %p129 = scmp.eq.s32.totalorder %s43, 3
      %p130 = por %p128, %p129
      %p132 = scmp.ne.s32.totalorder %s115, %s131
      %p133 = scmp.eq.s32.totalorder %s43, 0
      %p134 = por %p132, %p133
      %s135 = ssub.s32 %s45, %s52
      %p136 = scmp.eq.s32.totalorder %s135, 0
      %s138 = sadd.s32 %s137, 1
      %s139 = scalar_select %p136, %s137, %s138
      %p142 = pneg %p136
      %p143 = scmp.eq.s32.totalorder %s37, 3
      %p144 = por %p142, %p143
      %p145 = scmp.ne.s32.totalorder %s137, %s140
      %p146 = scmp.eq.s32.totalorder %s37, 0
      %p147 = por %p145, %p146
      %p148 = scmp.ne.s32.totalorder %s137, %s140
      %p149 = scmp.eq.s32.totalorder %s42, 3
      %p150 = por %p148, %p149
      %p151 = scmp.ne.s32.totalorder %s140, %s141
      %p152 = scmp.eq.s32.totalorder %s42, 0
      %p153 = por %p151, %p152
      %p154 = scmp.ne.s32.totalorder %s140, %s141
      %p155 = scmp.eq.s32.totalorder %s43, 3
      %p156 = por %p154, %p155
      %p158 = scmp.ne.s32.totalorder %s141, %s157
      %p159 = scmp.eq.s32.totalorder %s43, 0
      %p160 = por %p158, %p159
      %s161 = ssub.s32 %s45, %s52
      %p162 = scmp.eq.s32.totalorder %s161, 0
      %s164 = sadd.s32 %s163, 1
      %s165 = scalar_select %p162, %s163, %s164
      %p168 = pneg %p162
      %p169 = scmp.eq.s32.totalorder %s37, 3
      %p170 = por %p168, %p169
      %p171 = scmp.ne.s32.totalorder %s163, %s166
      %p172 = scmp.eq.s32.totalorder %s37, 0
      %p173 = por %p171, %p172
      %p174 = scmp.ne.s32.totalorder %s163, %s166
      %p175 = scmp.eq.s32.totalorder %s42, 3
      %p176 = por %p174, %p175
      %p177 = scmp.ne.s32.totalorder %s166, %s167
      %p178 = scmp.eq.s32.totalorder %s42, 0
      %p179 = por %p177, %p178
      %p180 = scmp.ne.s32.totalorder %s166, %s167
      %p181 = scmp.eq.s32.totalorder %s43, 3
      %p182 = por %p180, %p181
      %p184 = scmp.ne.s32.totalorder %s167, %s183
      %p185 = scmp.eq.s32.totalorder %s43, 0
      %p186 = por %p184, %p185
      %s187 = ssub.s32 %s45, %s52
      %p188 = scmp.eq.s32.totalorder %s187, 0
      %s190 = sadd.s32 %s189, 1
      %s191 = scalar_select %p188, %s189, %s190
      %p194 = pneg %p188
      %p195 = scmp.eq.s32.totalorder %s37, 3
      %p196 = por %p194, %p195
      %p197 = scmp.ne.s32.totalorder %s189, %s192
      %p198 = scmp.eq.s32.totalorder %s37, 0
      %p199 = por %p197, %p198
      %p200 = scmp.ne.s32.totalorder %s189, %s192
      %p201 = scmp.eq.s32.totalorder %s42, 3
      %p202 = por %p200, %p201
      %p203 = scmp.ne.s32.totalorder %s192, %s193
      %p204 = scmp.eq.s32.totalorder %s42, 0
      %p205 = por %p203, %p204
      %p206 = scmp.ne.s32.totalorder %s192, %s193
      %p207 = scmp.eq.s32.totalorder %s43, 3
      %p208 = por %p206, %p207
      %p210 = scmp.ne.s32.totalorder %s193, %s209
      %p211 = scmp.eq.s32.totalorder %s43, 0
      %p212 = por %p210, %p211
      %s213 = ssub.s32 %s45, %s52
      %p214 = scmp.eq.s32.totalorder %s213, 0
      %s216 = sadd.s32 %s215, 1
      %s217 = scalar_select %p214, %s215, %s216
      %p220 = pneg %p214
      %p221 = scmp.eq.s32.totalorder %s37, 3
      %p222 = por %p220, %p221
      %p223 = scmp.ne.s32.totalorder %s215, %s218
      %p224 = scmp.eq.s32.totalorder %s37, 0
      %p225 = por %p223, %p224
      %p226 = scmp.ne.s32.totalorder %s215, %s218
      %p227 = scmp.eq.s32.totalorder %s42, 3
      %p228 = por %p226, %p227
      %p229 = scmp.ne.s32.totalorder %s218, %s219
      %p230 = scmp.eq.s32.totalorder %s42, 0
      %p231 = por %p229, %p230
      %p232 = scmp.ne.s32.totalorder %s218, %s219
      %p233 = scmp.eq.s32.totalorder %s43, 3
      %p234 = por %p232, %p233
      %p236 = scmp.ne.s32.totalorder %s219, %s235
      %p237 = scmp.eq.s32.totalorder %s43, 0
      %p238 = por %p236, %p237
      %s239 = ssub.s32 %s45, %s52
      %p240 = scmp.eq.s32.totalorder %s239, 0
      %s242 = sadd.s32 %s241, 1
      %s243 = scalar_select %p240, %s241, %s242
      %p246 = pneg %p240
      %p247 = scmp.eq.s32.totalorder %s37, 3
      %p248 = por %p246, %p247
      %p249 = scmp.ne.s32.totalorder %s241, %s244
      %p250 = scmp.eq.s32.totalorder %s37, 0
      %p251 = por %p249, %p250
      %p252 = scmp.ne.s32.totalorder %s241, %s244
      %p253 = scmp.eq.s32.totalorder %s42, 3
      %p254 = por %p252, %p253
      %p255 = scmp.ne.s32.totalorder %s244, %s245
      %p256 = scmp.eq.s32.totalorder %s42, 0
      %p257 = por %p255, %p256
      %p258 = scmp.ne.s32.totalorder %s244, %s245
      %p259 = scmp.eq.s32.totalorder %s43, 3
      %p260 = por %p258, %p259
      %p262 = scmp.ne.s32.totalorder %s245, %s261
      %p263 = scmp.eq.s32.totalorder %s43, 0
      %p264 = por %p262, %p263
      %s265 = ssub.s32 %s45, %s52
      %p266 = scmp.eq.s32.totalorder %s265, 0
      %s268 = sadd.s32 %s267, 1
      %s269 = scalar_select %p266, %s267, %s268
      %p272 = pneg %p266
      %p273 = scmp.eq.s32.totalorder %s37, 3
      %p274 = por %p272, %p273
      %p275 = scmp.ne.s32.totalorder %s267, %s270
      %p276 = scmp.eq.s32.totalorder %s37, 0
      %p277 = por %p275, %p276
      %p278 = scmp.ne.s32.totalorder %s267, %s270
      %p279 = scmp.eq.s32.totalorder %s42, 3
      %p280 = por %p278, %p279
      %p281 = scmp.ne.s32.totalorder %s270, %s271
      %p282 = scmp.eq.s32.totalorder %s42, 0
      %p283 = por %p281, %p282
      %p284 = scmp.ne.s32.totalorder %s270, %s271
      %p285 = scmp.eq.s32.totalorder %s43, 3
      %p286 = por %p284, %p285
      %p288 = scmp.ne.s32.totalorder %s271, %s287
      %p289 = scmp.eq.s32.totalorder %s43, 0
      %p290 = por %p288, %p289
      %s291 = ssub.s32 %s45, %s52
      %p292 = scmp.eq.s32.totalorder %s291, 0
      %s294 = sadd.s32 %s293, 1
      %s295 = scalar_select %p292, %s293, %s294
      %p298 = pneg %p292
      %p299 = scmp.eq.s32.totalorder %s37, 3
      %p300 = por %p298, %p299
      %p301 = scmp.ne.s32.totalorder %s293, %s296
      %p302 = scmp.eq.s32.totalorder %s37, 0
      %p303 = por %p301, %p302
      %p304 = scmp.ne.s32.totalorder %s293, %s296
      %p305 = scmp.eq.s32.totalorder %s42, 3
      %p306 = por %p304, %p305
      %p307 = scmp.ne.s32.totalorder %s296, %s297
      %p308 = scmp.eq.s32.totalorder %s42, 0
      %p309 = por %p307, %p308
      %p310 = scmp.ne.s32.totalorder %s296, %s297
      %p311 = scmp.eq.s32.totalorder %s43, 3
      %p312 = por %p310, %p311
      %p314 = scmp.ne.s32.totalorder %s297, %s313
      %p315 = scmp.eq.s32.totalorder %s43, 0
      %p316 = por %p314, %p315
      %s317 = ssub.s32 %s45, %s52
      %p318 = scmp.eq.s32.totalorder %s317, 0
      %s320 = sadd.s32 %s319, 1
      %s321 = scalar_select %p318, %s319, %s320
      %p324 = pneg %p318
      %p325 = scmp.eq.s32.totalorder %s37, 3
      %p326 = por %p324, %p325
      %p327 = scmp.ne.s32.totalorder %s319, %s322
      %p328 = scmp.eq.s32.totalorder %s37, 0
      %p329 = por %p327, %p328
      %p330 = scmp.ne.s32.totalorder %s319, %s322
      %p331 = scmp.eq.s32.totalorder %s42, 3
      %p332 = por %p330, %p331
      %p333 = scmp.ne.s32.totalorder %s322, %s323
      %p334 = scmp.eq.s32.totalorder %s42, 0
      %p335 = por %p333, %p334
      %p336 = scmp.ne.s32.totalorder %s322, %s323
      %p337 = scmp.eq.s32.totalorder %s43, 3
      %p338 = por %p336, %p337
      %p340 = scmp.ne.s32.totalorder %s323, %s339
      %p341 = scmp.eq.s32.totalorder %s43, 0
      %p342 = por %p340, %p341
      %s343 = ssub.s32 %s45, %s52
      %p344 = scmp.eq.s32.totalorder %s343, 0
      %s346 = sadd.s32 %s345, 1
      %s347 = scalar_select %p344, %s345, %s346
      %p350 = pneg %p344
      %p351 = scmp.eq.s32.totalorder %s37, 3
      %p352 = por %p350, %p351
      %p353 = scmp.ne.s32.totalorder %s345, %s348
      %p354 = scmp.eq.s32.totalorder %s37, 0
      %p355 = por %p353, %p354
      %p356 = scmp.ne.s32.totalorder %s345, %s348
      %p357 = scmp.eq.s32.totalorder %s42, 3
      %p358 = por %p356, %p357
      %p359 = scmp.ne.s32.totalorder %s348, %s349
      %p360 = scmp.eq.s32.totalorder %s42, 0
      %p361 = por %p359, %p360
      %p362 = scmp.ne.s32.totalorder %s348, %s349
      %p363 = scmp.eq.s32.totalorder %s43, 3
      %p364 = por %p362, %p363
      %p366 = scmp.ne.s32.totalorder %s349, %s365
      %p367 = scmp.eq.s32.totalorder %s43, 0
      %p368 = por %p366, %p367
      %s369 = ssub.s32 %s45, %s52
      %p370 = scmp.eq.s32.totalorder %s369, 0
      %s372 = sadd.s32 %s371, 1
      %s373 = scalar_select %p370, %s371, %s372
      %p376 = pneg %p370
      %p377 = scmp.eq.s32.totalorder %s37, 3
      %p378 = por %p376, %p377
      %p379 = scmp.ne.s32.totalorder %s371, %s374
      %p380 = scmp.eq.s32.totalorder %s37, 0
      %p381 = por %p379, %p380
      %p382 = scmp.ne.s32.totalorder %s371, %s374
      %p383 = scmp.eq.s32.totalorder %s42, 3
      %p384 = por %p382, %p383
      %p385 = scmp.ne.s32.totalorder %s374, %s375
      %p386 = scmp.eq.s32.totalorder %s42, 0
      %p387 = por %p385, %p386
      %p388 = scmp.ne.s32.totalorder %s374, %s375
      %p389 = scmp.eq.s32.totalorder %s43, 3
      %p390 = por %p388, %p389
      %p392 = scmp.ne.s32.totalorder %s375, %s391
      %p393 = scmp.eq.s32.totalorder %s43, 0
      %p394 = por %p392, %p393
      %s395 = ssub.s32 %s45, %s52
      %p396 = scmp.eq.s32.totalorder %s395, 0
      %s398 = sadd.s32 %s397, 1
      %s399 = scalar_select %p396, %s397, %s398
      %p402 = pneg %p396
      %p403 = scmp.eq.s32.totalorder %s37, 3
      %p404 = por %p402, %p403
      %p405 = scmp.ne.s32.totalorder %s397, %s400
      %p406 = scmp.eq.s32.totalorder %s37, 0
      %p407 = por %p405, %p406
      %p408 = scmp.ne.s32.totalorder %s397, %s400
      %p409 = scmp.eq.s32.totalorder %s42, 3
      %p410 = por %p408, %p409
      %p411 = scmp.ne.s32.totalorder %s400, %s401
      %p412 = scmp.eq.s32.totalorder %s42, 0
      %p413 = por %p411, %p412
      %p414 = scmp.ne.s32.totalorder %s400, %s401
      %p415 = scmp.eq.s32.totalorder %s43, 3
      %p416 = por %p414, %p415
      %p418 = scmp.ne.s32.totalorder %s401, %s417
      %p419 = scmp.eq.s32.totalorder %s43, 0
      %p420 = por %p418, %p419
      %s421 = ssub.s32 %s44, %s56
      %p422 = scmp.eq.s32.totalorder %s421, 0
      %s424 = sadd.s32 %s423, 1
      %s425 = scalar_select %p422, %s423, %s424
      %p428 = pneg %p422
      %p429 = scmp.eq.s32.totalorder %s37, 3
      %p430 = por %p428, %p429
      %p431 = scmp.ne.s32.totalorder %s423, %s426
      %p432 = scmp.eq.s32.totalorder %s37, 0
      %p433 = por %p431, %p432
      %p434 = scmp.ne.s32.totalorder %s423, %s426
      %p435 = scmp.eq.s32.totalorder %s42, 3
      %p436 = por %p434, %p435
      %p437 = scmp.ne.s32.totalorder %s426, %s427
      %p438 = scmp.eq.s32.totalorder %s42, 0
      %p439 = por %p437, %p438
      %p440 = scmp.ne.s32.totalorder %s426, %s427
      %p441 = scmp.eq.s32.totalorder %s43, 3
      %p442 = por %p440, %p441
      %p444 = scmp.ne.s32.totalorder %s427, %s443
      %p445 = scmp.eq.s32.totalorder %s43, 0
      %p446 = por %p444, %p445
      %s447 = ssub.s32 %s44, %s56
      %s448 = ssub.s32 %s45, %s52
      %s449 = sor.u32 %s447, %s448
      %p450 = scmp.eq.s32.totalorder %s449, 0
      %s452 = sadd.s32 %s451, 1
      %s453 = scalar_select %p450, %s451, %s452
      %p456 = pneg %p450
      %p457 = scmp.eq.s32.totalorder %s37, 3
      %p458 = por %p456, %p457
      %p459 = scmp.ne.s32.totalorder %s451, %s454
      %p460 = scmp.eq.s32.totalorder %s37, 0
      %p461 = por %p459, %p460
      %p462 = scmp.ne.s32.totalorder %s451, %s454
      %p463 = scmp.eq.s32.totalorder %s42, 3
      %p464 = por %p462, %p463
      %p465 = scmp.ne.s32.totalorder %s454, %s455
      %p466 = scmp.eq.s32.totalorder %s42, 0
      %p467 = por %p465, %p466
      %p468 = scmp.ne.s32.totalorder %s454, %s455
      %p469 = scmp.eq.s32.totalorder %s43, 3
      %p470 = por %p468, %p469
      %p472 = scmp.ne.s32.totalorder %s455, %s471
      %p473 = scmp.eq.s32.totalorder %s43, 0
      %p474 = por %p472, %p473
      %p475 = scmp.le.s32.totalorder 1, %s37
      %p476 = scmp.lt.s32.totalorder %s37, 5
      %p477 = pnand %p475, %p476
      %p478 = pneg %p477
      // Predicated region
      $region9: #{tpu_custom_call.1} parent=5 // pred_check
        _
      $region10: #{tpu_custom_call.1} parent=5 // pred_check_branch
        %480 = sbr.rel (%p477) target = $region12
      $region11: #{tpu_custom_call.1} parent=5 // pred_region
        %s481 = ssub.s32 %s37, 1
      $region12: #{tpu_custom_call.1} parent=5 // pred_fallthru
        _
      %p482 = scmp.lt.s32.totalorder %s37, 4
      // Predicated region
      $region13: #{tpu_custom_call.1} parent=5 // pred_check
        %p483 = pneg %p482
      $region14: #{tpu_custom_call.1} parent=5 // pred_check_branch
        %485 = sbr.rel (%p483) target = $region16
      $region15: #{tpu_custom_call.1} parent=5 // pred_region
        // Predicated region
        $region17: #{tpu_custom_call.1} parent=15 // pred_check
          %p486 = pneg %p69
        $region18: #{tpu_custom_call.1} parent=15 // pred_check_branch
          %488 = sbr.rel (%p486) target = $region20
        $region19: #{tpu_custom_call.1} parent=15 // pred_region
          %p489 = scmp.lt.s32.totalorder %s44, 1
          %s490 = scalar_select %p489, %s44, 1
          %s491 = smul.addr %s490, 8
          %s492 = scalar_lea.vmem %s0, %s491
        $region20: #{tpu_custom_call.1} parent=15 // pred_fallthru
          _
        // Predicated region
        $region21: #{tpu_custom_call.1} parent=15 // pred_check
          %p493 = pneg %p95
        $region22: #{tpu_custom_call.1} parent=15 // pred_check_branch
          %495 = sbr.rel (%p493) target = $region24
        $region23: #{tpu_custom_call.1} parent=15 // pred_region
          %s496 = sand.u32 %s85, 1
          %s497 = scalar_lea.sflag [#allocation4], %s496
          %s498 = sand.u32 %s85, 1
          %s499 = scalar_lea.vmem [#allocation3], %s498
          %501 = vsyncadd %s497, 0
          %s502 = scalar_lea.hbm %s1, %s44
          %s504 = sshll.u32 %s502, 4
          %s505 = int_to_ptr.hbm [resolvable:$true] %s504
          %s506 = sshll.u32 %s499, 4
          %s507 = int_to_ptr.vmem [resolvable:$true] %s506
          %509 = dma.hbm_to_vmem [thread:$0]  %s505, 16, %s507, %s497
        $region24: #{tpu_custom_call.1} parent=15 // pred_fallthru
          _
        // Predicated region
        $region25: #{tpu_custom_call.1} parent=15 // pred_check
          %p510 = pneg %p121
        $region26: #{tpu_custom_call.1} parent=15 // pred_check_branch
          %512 = sbr.rel (%p510) target = $region28
        $region27: #{tpu_custom_call.1} parent=15 // pred_region
          %p513 = scmp.lt.s32.totalorder %s45, 1
          %s514 = scalar_select %p513, %s45, 1
          %s515 = smul.addr %s514, 4
          %s516 = smul.addr %s515, 4
          %s517 = scalar_lea.vmem %s2, %s516
        $region28: #{tpu_custom_call.1} parent=15 // pred_fallthru
          _
        // Predicated region
        $region29: #{tpu_custom_call.1} parent=15 // pred_check
          %p518 = pneg %p147
        $region30: #{tpu_custom_call.1} parent=15 // pred_check_branch
          %520 = sbr.rel (%p518) target = $region32
        $region31: #{tpu_custom_call.1} parent=15 // pred_region
          %s521 = sand.u32 %s37, 1
          %s522 = scalar_lea.sflag [#allocation7], %s521
          %s523 = sand.u32 %s137, 1
          %s524 = scalar_lea.vmem [#allocation6], %s523
          %526 = vsyncadd %s522, 0
          %s527 = scalar_lea.hbm %s3, %s45
          %s529 = sshll.u32 %s527, 4
          %s530 = int_to_ptr.hbm [resolvable:$true] %s529
          %s531 = sshll.u32 %s524, 4
          %s532 = int_to_ptr.vmem [resolvable:$true] %s531
          %534 = dma.hbm_to_vmem [thread:$0]  %s530, 16, %s532, %s522
        $region32: #{tpu_custom_call.1} parent=15 // pred_fallthru
          _
        // Predicated region
        $region33: #{tpu_custom_call.1} parent=15 // pred_check
          %p535 = pneg %p173
        $region34: #{tpu_custom_call.1} parent=15 // pred_check_branch
          %537 = sbr.rel (%p535) target = $region36
        $region35: #{tpu_custom_call.1} parent=15 // pred_region
          %p538 = scmp.lt.s32.totalorder %s45, 1
          %s539 = scalar_select %p538, %s45, 1
          %s540 = smul.addr %s539, 2
          %s541 = smul.addr %s540, 4
          %s542 = scalar_lea.vmem %s4, %s541
        $region36: #{tpu_custom_call.1} parent=15 // pred_fallthru
          _
        // Predicated region
        $region37: #{tpu_custom_call.1} parent=15 // pred_check
          %p543 = pneg %p199
        $region38: #{tpu_custom_call.1} parent=15 // pred_check_branch
          %545 = sbr.rel (%p543) target = $region40
        $region39: #{tpu_custom_call.1} parent=15 // pred_region
          %p546 = scmp.lt.s32.totalorder %s45, 1
          %s547 = scalar_select %p546, %s45, 1
          %s548 = scalar_lea.vmem %s5, %s547
        $region40: #{tpu_custom_call.1} parent=15 // pred_fallthru
          _
        // Predicated region
        $region41: #{tpu_custom_call.1} parent=15 // pred_check
          %p549 = pneg %p225
        $region42: #{tpu_custom_call.1} parent=15 // pred_check_branch
          %551 = sbr.rel (%p549) target = $region44
        $region43: #{tpu_custom_call.1} parent=15 // pred_region
          %p552 = scmp.lt.s32.totalorder %s45, 1
          %s553 = scalar_select %p552, %s45, 1
          %s554 = scalar_lea.vmem %s6, %s553
        $region44: #{tpu_custom_call.1} parent=15 // pred_fallthru
          _
        // Predicated region
        $region45: #{tpu_custom_call.1} parent=15 // pred_check
          %p555 = pneg %p251
        $region46: #{tpu_custom_call.1} parent=15 // pred_check_branch
          %557 = sbr.rel (%p555) target = $region48
        $region47: #{tpu_custom_call.1} parent=15 // pred_region
          %s558 = sand.u32 %s37, 1
          %s559 = scalar_lea.sflag [#allocation7], %s558
          %s560 = sand.u32 %s241, 1
          %s561 = scalar_lea.vmem [#allocation8], %s560
          %563 = vsyncadd %s559, 0
          %s564 = scalar_lea.hbm %s7, %s45
          %s566 = sshll.u32 %s564, 4
          %s567 = int_to_ptr.hbm [resolvable:$true] %s566
          %s568 = sshll.u32 %s561, 4
          %s569 = int_to_ptr.vmem [resolvable:$true] %s568
          %571 = dma.hbm_to_vmem [thread:$0]  %s567, 16, %s569, %s559
        $region48: #{tpu_custom_call.1} parent=15 // pred_fallthru
          _
        // Predicated region
        $region49: #{tpu_custom_call.1} parent=15 // pred_check
          %p572 = pneg %p277
        $region50: #{tpu_custom_call.1} parent=15 // pred_check_branch
          %574 = sbr.rel (%p572) target = $region52
        $region51: #{tpu_custom_call.1} parent=15 // pred_region
          %p575 = scmp.lt.s32.totalorder %s45, 1
          %s576 = scalar_select %p575, %s45, 1
          %s577 = smul.addr %s576, 4
          %s578 = smul.addr %s577, 4
          %s579 = scalar_lea.vmem %s8, %s578
        $region52: #{tpu_custom_call.1} parent=15 // pred_fallthru
          _
        // Predicated region
        $region53: #{tpu_custom_call.1} parent=15 // pred_check
          %p580 = pneg %p303
        $region54: #{tpu_custom_call.1} parent=15 // pred_check_branch
          %582 = sbr.rel (%p580) target = $region56
        $region55: #{tpu_custom_call.1} parent=15 // pred_region
          %p583 = scmp.lt.s32.totalorder %s45, 1
          %s584 = scalar_select %p583, %s45, 1
          %s585 = scalar_lea.vmem %s9, %s584
        $region56: #{tpu_custom_call.1} parent=15 // pred_fallthru
          _
        // Predicated region
        $region57: #{tpu_custom_call.1} parent=15 // pred_check
          %p586 = pneg %p329
        $region58: #{tpu_custom_call.1} parent=15 // pred_check_branch
          %588 = sbr.rel (%p586) target = $region60
        $region59: #{tpu_custom_call.1} parent=15 // pred_region
          %p589 = scmp.lt.s32.totalorder %s45, 1
          %s590 = scalar_select %p589, %s45, 1
          %s591 = smul.addr %s590, 8
          %s592 = smul.addr %s591, 4
          %s593 = scalar_lea.vmem %s10, %s592
        $region60: #{tpu_custom_call.1} parent=15 // pred_fallthru
          _
        // Predicated region
        $region61: #{tpu_custom_call.1} parent=15 // pred_check
          %p594 = pneg %p355
        $region62: #{tpu_custom_call.1} parent=15 // pred_check_branch
          %596 = sbr.rel (%p594) target = $region64
        $region63: #{tpu_custom_call.1} parent=15 // pred_region
          %p597 = scmp.lt.s32.totalorder %s45, 1
          %s598 = scalar_select %p597, %s45, 1
          %s599 = scalar_lea.vmem %s11, %s598
        $region64: #{tpu_custom_call.1} parent=15 // pred_fallthru
          _
        // Predicated region
        $region65: #{tpu_custom_call.1} parent=15 // pred_check
          %p600 = pneg %p381
        $region66: #{tpu_custom_call.1} parent=15 // pred_check_branch
          %602 = sbr.rel (%p600) target = $region68
        $region67: #{tpu_custom_call.1} parent=15 // pred_region
          %p603 = scmp.lt.s32.totalorder %s45, 1
          %s604 = scalar_select %p603, %s45, 1
          %s605 = scalar_lea.vmem %s12, %s604
        $region68: #{tpu_custom_call.1} parent=15 // pred_fallthru
          _
        // Predicated region
        $region69: #{tpu_custom_call.1} parent=15 // pred_check
          %p606 = pneg %p407
        $region70: #{tpu_custom_call.1} parent=15 // pred_check_branch
          %608 = sbr.rel (%p606) target = $region72
        $region71: #{tpu_custom_call.1} parent=15 // pred_region
          %s609 = sand.u32 %s397, 1
          %s610 = scalar_lea.sflag [#allocation10], %s609
          %s611 = sand.u32 %s397, 1
          %s612 = scalar_lea.vmem [#allocation9], %s611
          %614 = vsyncadd %s610, 0
          %s615 = scalar_lea.hbm %s13, %s45
          %s617 = sshll.u32 %s615, 4
          %s618 = int_to_ptr.hbm [resolvable:$true] %s617
          %s619 = sshll.u32 %s612, 4
          %s620 = int_to_ptr.vmem [resolvable:$true] %s619
          %622 = dma.hbm_to_vmem [thread:$0]  %s618, 16, %s620, %s610
        $region72: #{tpu_custom_call.1} parent=15 // pred_fallthru
          _
      $region16: #{tpu_custom_call.1} parent=5 // pred_fallthru
        _
      %p623 = scmp.le.s32.totalorder 1, %s37
      %p624 = scmp.lt.s32.totalorder %s37, 5
      %p625 = pnand %p623, %p624
      %p626 = pneg %p625
      // Predicated region
      $region73: #{tpu_custom_call.1} parent=5 // pred_check
        _
      $region74: #{tpu_custom_call.1} parent=5 // pred_check_branch
        %628 = sbr.rel (%p625) target = $region76
      $region75: #{tpu_custom_call.1} parent=5 // pred_region
        %s629 = ssub.s32 %s37, 1
        %s630 = sand.u32 %s88, 1
        %s631 = scalar_lea.sflag [#allocation4], %s630
        %s632 = sand.u32 %s88, 1
        %s633 = scalar_lea.vmem [#allocation3], %s632
        // Predicated region
        $region77: #{tpu_custom_call.1} parent=75 // pred_check
          %p634 = pneg %p101
        $region78: #{tpu_custom_call.1} parent=75 // pred_check_branch
          %636 = sbr.rel (%p634) target = $region80
        $region79: #{tpu_custom_call.1} parent=75 // pred_region
          %638 = dma.done %s631, 16
        $region80: #{tpu_custom_call.1} parent=75 // pred_fallthru
          _
        %s639 = sand.u32 %s42, 1
        %s640 = scalar_lea.sflag [#allocation7], %s639
        %s641 = sand.u32 %s140, 1
        %s642 = scalar_lea.vmem [#allocation6], %s641
        // Predicated region
        $region81: #{tpu_custom_call.1} parent=75 // pred_check
          %p643 = pneg %p153
        $region82: #{tpu_custom_call.1} parent=75 // pred_check_branch
          %645 = sbr.rel (%p643) target = $region84
        $region83: #{tpu_custom_call.1} parent=75 // pred_region
          %647 = dma.done %s640, 16
        $region84: #{tpu_custom_call.1} parent=75 // pred_fallthru
          _
        %s648 = sand.u32 %s42, 1
        %s649 = scalar_lea.sflag [#allocation7], %s648
        %s650 = sand.u32 %s244, 1
        %s651 = scalar_lea.vmem [#allocation8], %s650
        // Predicated region
        $region85: #{tpu_custom_call.1} parent=75 // pred_check
          %p652 = pneg %p257
        $region86: #{tpu_custom_call.1} parent=75 // pred_check_branch
          %654 = sbr.rel (%p652) target = $region88
        $region87: #{tpu_custom_call.1} parent=75 // pred_region
          %656 = dma.done %s649, 16
        $region88: #{tpu_custom_call.1} parent=75 // pred_fallthru
          _
        %s657 = sand.u32 %s400, 1
        %s658 = scalar_lea.sflag [#allocation10], %s657
        %s659 = sand.u32 %s400, 1
        %s660 = scalar_lea.vmem [#allocation9], %s659
        // Predicated region
        $region89: #{tpu_custom_call.1} parent=75 // pred_check
          %p661 = pneg %p413
        $region90: #{tpu_custom_call.1} parent=75 // pred_check_branch
          %663 = sbr.rel (%p661) target = $region92
        $region91: #{tpu_custom_call.1} parent=75 // pred_region
          %665 = dma.done %s658, 16
        $region92: #{tpu_custom_call.1} parent=75 // pred_fallthru
          _
        %p666 = scmp.lt.s32.totalorder %s46, 1
        %s667 = scalar_select %p666, %s46, 1
        %s668 = smul.addr %s667, 8
        %s669 = scalar_lea.vmem %s0, %s668
        %p670 = pneg %p75
        %p671 = pneg %p72
        %s672 = sand.u32 %s88, 1
        %s673 = scalar_lea.sflag [#allocation4], %s672
        %s674 = sand.u32 %s88, 1
        %s675 = scalar_lea.vmem [#allocation3], %s674
        %p676 = pneg %p101
        %p677 = pneg %p98
        %p678 = scmp.lt.s32.totalorder %s47, 1
        %s679 = scalar_select %p678, %s47, 1
        %s680 = smul.addr %s679, 4
        %s681 = smul.addr %s680, 4
        %s682 = scalar_lea.vmem %s2, %s681
        %p683 = pneg %p127
        %p684 = pneg %p124
        %s685 = sand.u32 %s42, 1
        %s686 = scalar_lea.sflag [#allocation7], %s685
        %s687 = sand.u32 %s140, 1
        %s688 = scalar_lea.vmem [#allocation6], %s687
        %p689 = pneg %p153
        %p690 = pneg %p150
        %p691 = scmp.lt.s32.totalorder %s47, 1
        %s692 = scalar_select %p691, %s47, 1
        %s693 = smul.addr %s692, 2
        %s694 = smul.addr %s693, 4
        %s695 = scalar_lea.vmem %s4, %s694
        %p696 = pneg %p179
        %p697 = pneg %p176
        %p698 = scmp.lt.s32.totalorder %s47, 1
        %s699 = scalar_select %p698, %s47, 1
        %s700 = scalar_lea.vmem %s5, %s699
        %p701 = pneg %p205
        %p702 = pneg %p202
        %p703 = scmp.lt.s32.totalorder %s47, 1
        %s704 = scalar_select %p703, %s47, 1
        %s705 = scalar_lea.vmem %s6, %s704
        %p706 = pneg %p231
        %p707 = pneg %p228
        %s708 = sand.u32 %s42, 1
        %s709 = scalar_lea.sflag [#allocation7], %s708
        %s710 = sand.u32 %s244, 1
        %s711 = scalar_lea.vmem [#allocation8], %s710
        %p712 = pneg %p257
        %p713 = pneg %p254
        %p714 = scmp.lt.s32.totalorder %s47, 1
        %s715 = scalar_select %p714, %s47, 1
        %s716 = smul.addr %s715, 4
        %s717 = smul.addr %s716, 4
        %s718 = scalar_lea.vmem %s8, %s717
        %p719 = pneg %p283
        %p720 = pneg %p280
        %p721 = scmp.lt.s32.totalorder %s47, 1
        %s722 = scalar_select %p721, %s47, 1
        %s723 = scalar_lea.vmem %s9, %s722
        %p724 = pneg %p309
        %p725 = pneg %p306
        %p726 = scmp.lt.s32.totalorder %s47, 1
        %s727 = scalar_select %p726, %s47, 1
        %s728 = smul.addr %s727, 8
        %s729 = smul.addr %s728, 4
        %s730 = scalar_lea.vmem %s10, %s729
        %p731 = pneg %p335
        %p732 = pneg %p332
        %p733 = scmp.lt.s32.totalorder %s47, 1
        %s734 = scalar_select %p733, %s47, 1
        %s735 = scalar_lea.vmem %s11, %s734
        %p736 = pneg %p361
        %p737 = pneg %p358
        %p738 = scmp.lt.s32.totalorder %s47, 1
        %s739 = scalar_select %p738, %s47, 1
        %s740 = scalar_lea.vmem %s12, %s739
        %p741 = pneg %p387
        %p742 = pneg %p384
        %s743 = sand.u32 %s400, 1
        %s744 = scalar_lea.sflag [#allocation10], %s743
        %s745 = sand.u32 %s400, 1
        %s746 = scalar_lea.vmem [#allocation9], %s745
        %p747 = pneg %p413
        %p748 = pneg %p410
        %p749 = pneg %p439
        %p750 = pneg %p436
        %s751 = sand.u32 %s426, 1
        %s752 = scalar_lea.sflag [#allocation5], %s751
        %s753 = sand.u32 %s426, 1
        %s754 = smul.addr %s753, 8
        %s755 = scalar_lea.vmem [#allocation11], %s754
        %p756 = pneg %p467
        %p757 = pneg %p464
        %s758 = sand.u32 %s454, 1
        %s759 = scalar_lea.sflag [#allocation13], %s758
        %s760 = sand.u32 %s454, 1
        %s761 = smul.addr %s760, 8
        %s762 = scalar_lea.vmem [#allocation12], %s761
        %p763 = scmp.lt.s32.totalorder %s46, 1
        %s764 = scalar_select %p763, %s46, 1
        %s765 = smul.addr %s764, 8
        %s766 = scalar_lea.vmem %s0, %s765
        %p767 = scmp.lt.s32.totalorder %s47, 1
        %s768 = scalar_select %p767, %s47, 1
        %s769 = smul.addr %s768, 4
        %s770 = smul.addr %s769, 4
        %s771 = scalar_lea.vmem %s2, %s770
        %p772 = scmp.lt.s32.totalorder %s47, 1
        %s773 = scalar_select %p772, %s47, 1
        %s774 = smul.addr %s773, 2
        %s775 = smul.addr %s774, 4
        %s776 = scalar_lea.vmem %s4, %s775
        %p777 = scmp.lt.s32.totalorder %s47, 1
        %s778 = scalar_select %p777, %s47, 1
        %s779 = scalar_lea.vmem %s5, %s778
        %p780 = scmp.lt.s32.totalorder %s47, 1
        %s781 = scalar_select %p780, %s47, 1
        %s782 = scalar_lea.vmem %s6, %s781
        %p783 = scmp.lt.s32.totalorder %s47, 1
        %s784 = scalar_select %p783, %s47, 1
        %s785 = smul.addr %s784, 4
        %s786 = smul.addr %s785, 4
        %s787 = scalar_lea.vmem %s8, %s786
        %p788 = scmp.lt.s32.totalorder %s47, 1
        %s789 = scalar_select %p788, %s47, 1
        %s790 = scalar_lea.vmem %s9, %s789
        %p791 = scmp.lt.s32.totalorder %s47, 1
        %s792 = scalar_select %p791, %s47, 1
        %s793 = smul.addr %s792, 8
        %s794 = smul.addr %s793, 4
        %s795 = scalar_lea.vmem %s10, %s794
        %p796 = scmp.lt.s32.totalorder %s47, 1
        %s797 = scalar_select %p796, %s47, 1
        %s798 = scalar_lea.vmem %s11, %s797
        %p799 = scmp.lt.s32.totalorder %s47, 1
        %s800 = scalar_select %p799, %s47, 1
        %s801 = scalar_lea.vmem %s12, %s800
        %p803 = scmp.eq.s32.totalorder %s47, 0
        // Predicated region
        $region93: #{tpu_custom_call.1} parent=75 // pred_check
          %p804 = pneg %p803
        $region94: #{tpu_custom_call.1} parent=75 // pred_check_branch
          %806 = sbr.rel (%p804) target = $region96
        $region95: #{tpu_custom_call.1} parent=75 // pred_region
          %v807 = vld [vmem:[%s766] sm:$0xff]
          %vm808 = vcmask 261120
          %809 = vst.msk [vmem:[%s755] sm:$0xff] %vm808, %v807
        $region96: #{tpu_custom_call.1} parent=75 // pred_fallthru
          _
        %v810 = vld [vmem:[%s755] sm:$0xff]
        %v811 = vpack.c.bf16 %v810, %v810
        %v812 = vld [vmem:[%s771] sm:$0xf]
        %v813 = vld [vmem:[%s771 + $0x4] sm:$0xf]
        %v814 = vld [vmem:[%s771 + $0x8] sm:$0xf]
        %v815 = vld [vmem:[%s771 + $0xc] sm:$0xf]
        %v816 = vld [vmem:[%s642] sm:$0x1]
        %v818 = vperm.slane %v816, 0
        %v824 = vunpack.c.l.b16 %v812
        %v825 = vunpack.c.l.b16 %v813
        %v826 = vunpack.c.l.b16 %v814
        %v827 = vunpack.c.l.b16 %v815
        %v828 = vpack.c.b16 %v825, %v824
        %v829 = vpack.c.b16 %v827, %v826
        %vm832 = vcmask 261120
        %v834 = vsel %vm832, %v811, 0
        %836 = vmatpush.bf16.msra.mxu0 0
        %837 = vmatpush.bf16.msra.mxu0 0
        %838 = vmatpush.bf16.msra.mxu0 0
        %839 = vmatpush.bf16.msra.mxu0 0
        %840 = vmatpush.bf16.msra.mxu0 0
        %841 = vmatpush.bf16.msra.mxu0 0
        %842 = vmatpush.bf16.msra.mxu0 %v829
        %843 = vmatpush.bf16.msra.mxu0 %v828
        %844 = vmatmul.bf16.gmra.mxu0 %v834
        %v845 = vpop.f32.mrf.mxu0
        %v846 = vadd.f32 %v818, %v845
        %v847 = vpop.f32.mrf.mxu0
        %848 = vdwg.mxu0
        %v849 = vmul.f32 %v846, 0.35355338
        %v850 = vpack.c.bf16 %v849, %v849
        %v851 = vpack.c.bf16 %v846, %v846
        %v853 = vunpack.c.l.b16 %v851
        %v854 = vpack.c.b16 %v853, %v853
        %855 = vrot.lane.b32.xlu0 %v854, 112
        %v856 = vpop.permute.xlu0 %855
        %vm857 = vcmask 64512
        %v859 = vsel %vm857, %v850, 0
        %v862 = vsel %vm857, %v856, 0
        %864 = vmatpush.bf16.xpose.msra.mxu0 0
        %865 = vmatpush.bf16.xpose.msra.mxu0 0
        %866 = vmatpush.bf16.xpose.msra.mxu0 0
        %867 = vmatpush.bf16.xpose.msra.mxu0 0
        %868 = vmatpush.bf16.xpose.msra.mxu0 0
        %869 = vmatpush.bf16.xpose.msra.mxu0 0
        %870 = vmatpush.bf16.xpose.msra.mxu0 0
        %871 = vmatpush.bf16.xpose.msra.mxu0 %v862
        %872 = vmatmul.bf16.gmra.mxu0 %v859
        %v873 = vpop.f32.mrf.mxu0
        %v874 = vadd.f32 0.0, %v873
        %v875 = vpop.f32.mrf.mxu0
        %876 = vdwg.mxu0
        %877 = vst.msk [vmem:[#allocation2] sm:$0xff] %vm857, %v874
        %v879 = vunpack.c.l.b16 %v850
        %v880 = vpack.c.b16 %v879, %v879
        %881 = vrot.lane.b32.xlu0 %v880, 120
        %v882 = vpop.permute.xlu0 %881
        %883 = vrot.lane.b32.xlu0 %v854, 104
        %v884 = vpop.permute.xlu0 %883
        %v886 = vsel %vm857, %v882, 0
        %v889 = vsel %vm857, %v884, 0
        %891 = vmatpush.bf16.xpose.msra.mxu0 0
        %892 = vmatpush.bf16.xpose.msra.mxu0 0
        %893 = vmatpush.bf16.xpose.msra.mxu0 0
        %894 = vmatpush.bf16.xpose.msra.mxu0 0
        %895 = vmatpush.bf16.xpose.msra.mxu0 0
        %896 = vmatpush.bf16.xpose.msra.mxu0 0
        %897 = vmatpush.bf16.xpose.msra.mxu0 0
        %898 = vmatpush.bf16.xpose.msra.mxu0 %v889
        %899 = vmatmul.bf16.gmra.mxu0 %v886
        %v900 = vpop.f32.mrf.mxu0
        %v901 = vadd.f32 0.0, %v900
        %v902 = vpop.f32.mrf.mxu0
        %903 = vdwg.mxu0
        %s904 = scalar_lea.vmem [#allocation2], 8
        %905 = vst.msk [vmem:[%s904] sm:$0xff] %vm857, %v901
        %v906 = vld [vmem:[#allocation2] sm:$0xff]
        %v907 = vld [vmem:[#allocation2 + $0x8] sm:$0xff]
        %v908 = vld [vmem:[%s633] sm:$0x1]
        %v910 = vperm.slane %v908, 0
        %v912 = vadd.f32 %v906, %v910
        %v913 = vadd.f32 %v907, %v910
        %v914 = vsel %vm857, %v912, -inf
        %915 = vmax.xlane.f32.xlu0 %v914
        %v916 = vpop.xlane.xlu0 %915
        %v917 = vsel %vm857, %v913, -inf
        %918 = vmax.xlane.f32.xlu0 %v917
        %v919 = vpop.xlane.xlu0 %918
        %v920 = vsub.f32 %v912, %v916
        %v921 = vsub.f32 %v913, %v919
        %v922 = vmul.f32 %v920, 1.442695
        %v923 = vpow.pop %v922
        %v924 = vmul.f32 %v921, 1.442695
        %v925 = vpow.pop %v924
        %v926 = vsel %vm857, %v923, 0.0
        %927 = vadd.xlane.f32.xlu0 %v926
        %v928 = vpop.xlane.xlu0 %927
        %v929 = vsel %vm857, %v925, 0.0
        %930 = vadd.xlane.f32.xlu0 %v929
        %v931 = vpop.xlane.xlu0 %930
        %v932 = vrcp.pop %v928
        %v933 = vrcp.pop %v931
        %v934 = vmul.f32 %v923, %v932
        %v935 = vmul.f32 %v925, %v933
        %v936 = vpack.c.bf16 %v934, %v934
        %v937 = vpack.c.bf16 %v935, %v935
        %vm938 = vcmask 60416
        %939 = vst.msk [vmem:[%s762] sm:$0xf] %vm938, %v936
        %940 = vst.msk [vmem:[%s762 + $0x4] sm:$0xf] %vm938, %v937
        %941 = vrot.lane.b32.xlu0 %v854, 96
        %v942 = vpop.permute.xlu0 %941
        %v944 = vsel %vm857, %v936, 0
        %vm946 = vcmask 1043456
        %v948 = vsel %vm946, %v942, 0
        %950 = vmatpush.bf16.msra.mxu0 0
        %951 = vmatpush.bf16.msra.mxu0 0
        %952 = vmatpush.bf16.msra.mxu0 0
        %953 = vmatpush.bf16.msra.mxu0 0
        %954 = vmatpush.bf16.msra.mxu0 0
        %955 = vmatpush.bf16.msra.mxu0 0
        %956 = vmatpush.bf16.msra.mxu0 0
        %957 = vmatpush.bf16.msra.mxu0 %v948
        %958 = vmatmul.bf16.gmra.mxu0 %v944
        %v959 = vpop.f32.mrf.mxu0
        %v960 = vadd.f32 0.0, %v959
        %v961 = vpop.f32.mrf.mxu0
        %962 = vdwg.mxu0
        %963 = vrot.lane.b32.xlu0 %v854, 88
        %v964 = vpop.permute.xlu0 %963
        %v966 = vsel %vm857, %v937, 0
        %v969 = vsel %vm946, %v964, 0
        %971 = vmatpush.bf16.msra.mxu0 0
        %972 = vmatpush.bf16.msra.mxu0 0
        %973 = vmatpush.bf16.msra.mxu0 0
        %974 = vmatpush.bf16.msra.mxu0 0
        %975 = vmatpush.bf16.msra.mxu0 0
        %976 = vmatpush.bf16.msra.mxu0 0
        %977 = vmatpush.bf16.msra.mxu0 0
        %978 = vmatpush.bf16.msra.mxu0 %v969
        %979 = vmatmul.bf16.gmra.mxu0 %v966
        %v980 = vpop.f32.mrf.mxu0
        %v981 = vadd.f32 0.0, %v980
        %v982 = vpop.f32.mrf.mxu0
        %983 = vdwg.mxu0
        %985 = vrot.lane.b32.xlu0 %v981, 8
        %v986 = vpop.permute.xlu0 %985
        %v988 = vsel %vm857, %v960, %v986
        %v989 = vpack.c.bf16 %v988, %v988
        %v990 = vld [vmem:[%s776] sm:$0xf]
        %v991 = vld [vmem:[%s776 + $0x4] sm:$0xf]
        %v992 = vld [vmem:[%s779] sm:$0x1]
        %v994 = vperm.slane %v992, 0
        %v998 = vunpack.c.l.b16 %v990
        %v999 = vunpack.c.l.b16 %v991
        %v1000 = vpack.c.b16 %v999, %v998
        %vm1002 = vcmask 130048
        %v1004 = vsel %vm1002, %v989, 0
        %1006 = vmatpush.bf16.msra.mxu0 0
        %1007 = vmatpush.bf16.msra.mxu0 0
        %1008 = vmatpush.bf16.msra.mxu0 0
        %1009 = vmatpush.bf16.msra.mxu0 0
        %1010 = vmatpush.bf16.msra.mxu0 0
        %1011 = vmatpush.bf16.msra.mxu0 0
        %1012 = vmatpush.bf16.msra.mxu0 0
        %1013 = vmatpush.bf16.msra.mxu0 %v1000
        %1014 = vmatmul.bf16.gmra.mxu0 %v1004
        %v1015 = vpop.f32.mrf.mxu0
        %v1016 = vadd.f32 %v994, %v1015
        %v1017 = vpop.f32.mrf.mxu0
        %1018 = vdwg.mxu0
        %v1019 = vadd.f32 %v1016, %v810
        %v1020 = vld [vmem:[%s782] sm:$0x1]
        %v1021 = vld [vmem:[%s651] sm:$0x1]
        %v1022 = vsel %vm832, %v1019, 0.0
        %1023 = vadd.xlane.f32.xlu0 %v1022
        %v1024 = vpop.xlane.xlu0 %1023
        %v1025 = vrcp.pop 32.0
        %v1026 = vmul.f32 32.0, %v1025
        %v1027 = vsub.f32 1.0, %v1026
        %v1028 = vmul.f32 %v1025, %v1027
        %v1029 = vadd.f32 %v1025, %v1028
        %vm1030 = vweird.f32 %v1025
        %v1031 = vsel %vm1030, %v1025, %v1029
        %v1032 = vmul.f32 %v1024, %v1031
        %v1033 = vsub.f32 %v1019, %v1032
        %v1034 = vmul.f32 %v1033, %v1033
        %v1035 = vsel %vm832, %v1034, 0.0
        %1036 = vadd.xlane.f32.xlu0 %v1035
        %v1037 = vpop.xlane.xlu0 %1036
        %v1038 = vmul.f32 %v1037, %v1031
        %v1039 = vadd.f32 %v1038, 1e-05
        %v1040 = vrsqrt.pop %v1039
        %v1041 = vmul.f32 %v1040, %v1039
        %v1042 = vmul.f32 %v1041, %v1040
        %v1043 = vmul.f32 0.5, %v1042
        %v1044 = vsub.f32 1.5, %v1043
        %v1045 = vmul.f32 %v1040, %v1044
        %vm1046 = vweird.f32 %v1039
        %vm1047 = vweird.f32 %v1040
        %vm1048 = vmor %vm1046, %vm1047
        %v1049 = vsel %vm1048, %v1040, %v1045
        %v1050 = vmul.f32 %v1033, %v1049
        %v1052 = vperm.slane %v1020, 0
        %v1054 = vmul.f32 %v1050, %v1052
        %v1056 = vperm.slane %v1021, 0
        %v1058 = vadd.f32 %v1054, %v1056
        %v1059 = vpack.c.bf16 %v1058, %v1058
        %v1060 = vld [vmem:[%s787] sm:$0xf]
        %v1061 = vld [vmem:[%s787 + $0x4] sm:$0xf]
        %v1062 = vld [vmem:[%s787 + $0x8] sm:$0xf]
        %v1063 = vld [vmem:[%s787 + $0xc] sm:$0xf]
        %v1064 = vld [vmem:[%s790] sm:$0x1]
        %v1066 = vperm.slane %v1064, 0
        %v1072 = vunpack.c.l.b16 %v1060
        %v1073 = vunpack.c.l.b16 %v1061
        %v1074 = vunpack.c.l.b16 %v1062
        %v1075 = vunpack.c.l.b16 %v1063
        %v1076 = vpack.c.b16 %v1073, %v1072
        %v1077 = vpack.c.b16 %v1075, %v1074
        %v1081 = vsel %vm832, %v1059, 0
        %1083 = vmatpush.bf16.msra.mxu0 0
        %1084 = vmatpush.bf16.msra.mxu0 0
        %1085 = vmatpush.bf16.msra.mxu0 0
        %1086 = vmatpush.bf16.msra.mxu0 0
        %1087 = vmatpush.bf16.msra.mxu0 0
        %1088 = vmatpush.bf16.msra.mxu0 0
        %1089 = vmatpush.bf16.msra.mxu0 %v1077
        %1090 = vmatpush.bf16.msra.mxu0 %v1076
        %1091 = vmatmul.bf16.gmra.mxu0 %v1081
        %v1092 = vpop.f32.mrf.mxu0
        %v1093 = vadd.f32 %v1066, %v1092
        %v1094 = vpop.f32.mrf.mxu0
        %1095 = vdwg.mxu0
        %v1096 = vmul.f32 %v1093, 0.5
        %v1097 = vmul.f32 %v1093, %v1093
        %v1098 = vmul.f32 %v1093, %v1097
        %v1099 = vmul.f32 %v1098, 0.044715
        %v1100 = vadd.f32 %v1093, %v1099
        %v1101 = vmul.f32 %v1100, 0.7978846
        %v1102 = vtanh.pop %v1101
        %v1103 = vadd.f32 %v1102, 1.0
        %v1104 = vmul.f32 %v1096, %v1103
        %v1105 = vpack.c.bf16 %v1104, %v1104
        %v1106 = vld [vmem:[%s795] sm:$0xf]
        %v1107 = vld [vmem:[%s795 + $0x4] sm:$0xf]
        %v1108 = vld [vmem:[%s795 + $0x8] sm:$0xf]
        %v1109 = vld [vmem:[%s795 + $0xc] sm:$0xf]
        %v1110 = vld [vmem:[%s795 + $0x10] sm:$0xf]
        %v1111 = vld [vmem:[%s795 + $0x14] sm:$0xf]
        %v1112 = vld [vmem:[%s795 + $0x18] sm:$0xf]
        %v1113 = vld [vmem:[%s795 + $0x1c] sm:$0xf]
        %v1114 = vld [vmem:[%s798] sm:$0x1]
        %v1116 = vperm.slane %v1114, 0
        %v1126 = vunpack.c.l.b16 %v1106
        %v1127 = vunpack.c.l.b16 %v1107
        %v1128 = vunpack.c.l.b16 %v1108
        %v1129 = vunpack.c.l.b16 %v1109
        %v1130 = vunpack.c.l.b16 %v1110
        %v1131 = vunpack.c.l.b16 %v1111
        %v1132 = vunpack.c.l.b16 %v1112
        %v1133 = vunpack.c.l.b16 %v1113
        %v1134 = vpack.c.b16 %v1127, %v1126
        %v1135 = vpack.c.b16 %v1129, %v1128
        %v1136 = vpack.c.b16 %v1131, %v1130
        %v1137 = vpack.c.b16 %v1133, %v1132
        %vm1142 = vcmask 523264
        %v1144 = vsel %vm1142, %v1105, 0
        %1146 = vmatpush.bf16.msra.mxu0 0
        %1147 = vmatpush.bf16.msra.mxu0 0
        %1148 = vmatpush.bf16.msra.mxu0 0
        %1149 = vmatpush.bf16.msra.mxu0 0
        %1150 = vmatpush.bf16.msra.mxu0 %v1137
        %1151 = vmatpush.bf16.msra.mxu0 %v1136
        %1152 = vmatpush.bf16.msra.mxu0 %v1135
        %1153 = vmatpush.bf16.msra.mxu0 %v1134
        %1154 = vmatmul.bf16.gmra.mxu0 %v1144
        %v1155 = vpop.f32.mrf.mxu0
        %v1156 = vadd.f32 %v1116, %v1155
        %v1157 = vpop.f32.mrf.mxu0
        %1158 = vdwg.mxu0
        %v1159 = vadd.f32 %v1156, %v1058
        %v1160 = vld [vmem:[%s801] sm:$0x1]
        %v1161 = vld [vmem:[%s660] sm:$0x1]
        %v1162 = vsel %vm832, %v1159, 0.0
        %1163 = vadd.xlane.f32.xlu0 %v1162
        %v1164 = vpop.xlane.xlu0 %1163
        %v1165 = vmul.f32 %v1164, %v1031
        %v1166 = vsub.f32 %v1159, %v1165
        %v1167 = vmul.f32 %v1166, %v1166
        %v1168 = vsel %vm832, %v1167, 0.0
        %1169 = vadd.xlane.f32.xlu0 %v1168
        %v1170 = vpop.xlane.xlu0 %1169
        %v1171 = vmul.f32 %v1170, %v1031
        %v1172 = vadd.f32 %v1171, 1e-05
        %v1173 = vrsqrt.pop %v1172
        %v1174 = vmul.f32 %v1173, %v1172
        %v1175 = vmul.f32 %v1174, %v1173
        %v1176 = vmul.f32 0.5, %v1175
        %v1177 = vsub.f32 1.5, %v1176
        %v1178 = vmul.f32 %v1173, %v1177
        %vm1179 = vweird.f32 %v1172
        %vm1180 = vweird.f32 %v1173
        %vm1181 = vmor %vm1179, %vm1180
        %v1182 = vsel %vm1181, %v1173, %v1178
        %v1183 = vmul.f32 %v1166, %v1182
        %v1185 = vperm.slane %v1160, 0
        %v1187 = vmul.f32 %v1183, %v1185
        %v1189 = vperm.slane %v1161, 0
        %v1191 = vadd.f32 %v1187, %v1189
        %1192 = vst.msk [vmem:[%s755] sm:$0xff] %vm832, %v1191
        %s1193 = sand.u32 %s426, 1
        %s1194 = scalar_lea.sflag [#allocation5], %s1193
        %s1195 = sand.u32 %s426, 1
        %s1196 = smul.addr %s1195, 8
        %s1197 = scalar_lea.vmem [#allocation11], %s1196
        %s1198 = sand.u32 %s454, 1
        %s1199 = scalar_lea.sflag [#allocation13], %s1198
        %s1200 = sand.u32 %s454, 1
        %s1201 = smul.addr %s1200, 8
        %s1202 = scalar_lea.vmem [#allocation12], %s1201
        // Predicated region
        $region97: #{tpu_custom_call.1} parent=75 // pred_check
          %p1203 = pneg %p436
        $region98: #{tpu_custom_call.1} parent=75 // pred_check_branch
          %1205 = sbr.rel (%p1203) target = $region100
        $region99: #{tpu_custom_call.1} parent=75 // pred_region
          %1207 = vsyncadd %s1194, 0
          %s1208 = smul.addr %s46, 8
          %s1209 = scalar_lea.hbm %s14, %s1208
          %s1211 = sshll.u32 %s1197, 4
          %s1212 = int_to_ptr.vmem [resolvable:$true] %s1211
          %s1213 = sshll.u32 %s1209, 4
          %s1214 = int_to_ptr.hbm [resolvable:$true] %s1213
          %1216 = dma.vmem_to_hbm [thread:$0]  %s1212, 128, %s1214, %s1194
        $region100: #{tpu_custom_call.1} parent=75 // pred_fallthru
          _
        // Predicated region
        $region101: #{tpu_custom_call.1} parent=75 // pred_check
          %p1217 = pneg %p464
        $region102: #{tpu_custom_call.1} parent=75 // pred_check_branch
          %1219 = sbr.rel (%p1217) target = $region104
        $region103: #{tpu_custom_call.1} parent=75 // pred_region
          %1221 = vsyncadd %s1199, 0
          %s1222 = smul.addr %s47, 2
          %s1223 = smul.addr %s46, 4
          %s1224 = sadd.s32 %s1222, %s1223
          %s1225 = smul.addr %s1224, 4
          %s1226 = scalar_lea.hbm %s15, %s1225
          %s1227 = sshll.u32 %s1202, 4
          %s1228 = int_to_ptr.vmem [resolvable:$true] %s1227
          %s1229 = sshll.u32 %s1226, 4
          %s1230 = int_to_ptr.hbm [resolvable:$true] %s1229
          %1235 = dma.vmem_to_hbm [thread:$0]  %s1228, 128, %s1230, %s1199, 64, 64, 4
        $region104: #{tpu_custom_call.1} parent=75 // pred_fallthru
          _
      $region76: #{tpu_custom_call.1} parent=5 // pred_fallthru
        _
      %p1236 = scmp.le.s32.totalorder 2, %s37
      // Predicated region
      $region105: #{tpu_custom_call.1} parent=5 // pred_check
        %p1237 = pneg %p1236
      $region106: #{tpu_custom_call.1} parent=5 // pred_check_branch
        %1239 = sbr.rel (%p1237) target = $region108
      $region107: #{tpu_custom_call.1} parent=5 // pred_region
        %s1240 = ssub.s32 %s37, 2
        // Predicated region
        $region109: #{tpu_custom_call.1} parent=107 // pred_check
          %p1241 = pneg %p442
        $region110: #{tpu_custom_call.1} parent=107 // pred_check_branch
          %1243 = sbr.rel (%p1241) target = $region112
        $region111: #{tpu_custom_call.1} parent=107 // pred_region
          %s1244 = sand.u32 %s427, 1
          %s1245 = scalar_lea.sflag [#allocation5], %s1244
          %s1246 = sand.u32 %s427, 1
          %s1247 = smul.addr %s1246, 8
          %s1248 = scalar_lea.vmem [#allocation11], %s1247
          %1250 = dma.done %s1245, 128
        $region112: #{tpu_custom_call.1} parent=107 // pred_fallthru
          _
        // Predicated region
        $region113: #{tpu_custom_call.1} parent=107 // pred_check
          %p1251 = pneg %p470
        $region114: #{tpu_custom_call.1} parent=107 // pred_check_branch
          %1253 = sbr.rel (%p1251) target = $region116
        $region115: #{tpu_custom_call.1} parent=107 // pred_region
          %s1254 = sand.u32 %s455, 1
          %s1255 = scalar_lea.sflag [#allocation13], %s1254
          %s1256 = sand.u32 %s455, 1
          %s1257 = smul.addr %s1256, 8
          %s1258 = scalar_lea.vmem [#allocation12], %s1257
          %1260 = dma.done %s1255, 128
        $region116: #{tpu_custom_call.1} parent=107 // pred_fallthru
          _
      $region108: #{tpu_custom_call.1} parent=5 // pred_fallthru
        _
    $region6: #{tpu_custom_call.1} parent=1 // loop_footer
      %s41 = sadd.s32 1, %s37
    $region7: #{tpu_custom_call.1} parent=1 // loop_footer_branch
      %36 = sbr.rel target = $region3
    $region8: #{tpu_custom_call.1} parent=1 // loop_exit
      _
    %1261 = vsyncpa [#allocation4], 1
    %s1262 = scalar_lea.sflag [#allocation4], 1
    %1263 = vsyncpa %s1262, 1
    %1264 = vsyncpa [#allocation7], 1
    %s1265 = scalar_lea.sflag [#allocation7], 1
    %1266 = vsyncpa %s1265, 1
    %1267 = vsyncpa [#allocation10], 1
    %s1268 = scalar_lea.sflag [#allocation10], 1
    %1269 = vsyncpa %s1268, 1
    %1270 = vsyncpa [#allocation5], 1
    %s1271 = scalar_lea.sflag [#allocation5], 1
    %1272 = vsyncpa %s1271, 1
    %1273 = vsyncpa [#allocation13], 1
    %s1274 = scalar_lea.sflag [#allocation13], 1
    %1275 = vsyncpa %s1274, 1

</llo_original>
